<compile_context>
chip_gen: v6e
topology: v6e:2x2x1
jax: 0.10.0
libtpu: 0.0.40
codegen_flags: <defaults>
</compile_context>

<pallas_src>
from functools import partial

import jax
import jax.numpy as jnp
from jax import lax
from jax.experimental import pallas as pl
from jax.experimental.pallas import tpu as pltpu

_EPS = 1e-8          # torch.nn.CosineSimilarity default eps
_TEMP = 0.07         # temperature used in forward()
_NEG_FILL = -10.0    # masked_fill value on the diagonal (pre-temperature)

_TM_CANDIDATES = (1024, 512, 256, 128)


def _round_up(x, m):
    return -(-x // m) * m


def _vmem_capacity_bytes():
    """Physical per-core VMEM; falls back to v7x's 64 MiB if the query fails."""
    try:
        cap = int(getattr(pltpu.get_tpu_info(), "vmem_capacity_bytes", 0))
        if cap > 0:
            return cap
    except Exception:
        pass
    return 64 << 20


def _vmem_estimate(tm, bp, dp, in_itemsize, mm_itemsize):
    """Rough per-step VMEM footprint in bytes (only used to size TM)."""
    k_resident = 2 * bp * dp * mm_itemsize                   # normalized keys (x2 covers the
                                                             # double-buffer fallback path)
    q_tiles = tm * dp * (2 * in_itemsize + 4 + mm_itemsize)  # pipelined q tile + f32 / q_hat copies
    km_tiles = tm * dp * (2 * in_itemsize + 4)               # matching-key tile + f32 copy
    logits = 3 * tm * bp * 4                                 # ~3 live (TM, Bp) 32-bit intermediates
    out_tiles = 4 * tm * 4
    return k_resident + q_tiles + km_tiles + logits + out_tiles


def _choose_tm(bp, dp, in_itemsize, mm_itemsize, budget):
    cands = [t for t in _TM_CANDIDATES if t <= bp and bp % t == 0] or [128]
    # Guarantee >=2 row tiles when B allows it so the "parallel" grid axis can
    # actually be sharded across v7x's two TensorCores (harmless on v5e/v6e).
    multi = [t for t in cands if bp // t >= 2]
    if multi:
        cands = multi
    for tm in cands:
        if _vmem_estimate(tm, bp, dp, in_itemsize, mm_itemsize) <= budget:
            return tm
    # TODO(synk): for very large B, add an inner key-axis (flash-style online
    # logsumexp) loop so (TM, Bp) logits never materialize at full width,
    # instead of collapsing to the smallest row tile.
    return cands[-1]


def _patch_nce_kernel(q_ref, km_ref, khat_ref, loss_ref, *, b_actual, mm_dtype, hi_prec):
    tm, dp = q_ref.shape
    bp = khat_ref.shape[1]
    inv_t = 1.0 / _TEMP

    # Global row offset of this tile (for the diagonal -10 fill).
    row0 = pl.multiple_of(pl.program_id(0) * tm, tm)

    q = q_ref[...].astype(jnp.float32)       # (TM, Dp)
    km = km_ref[...].astype(jnp.float32)     # (TM, Dp) matching key rows (original values)

    # ---- positive logits: exact f32 dot on matching rows --------------------
    q_sq = jnp.sum(q * q, axis=-1, keepdims=True)           # (TM, 1)
    km_sq = jnp.sum(km * km, axis=-1, keepdims=True)        # (TM, 1)
    pos_dot = jnp.sum(q * km, axis=-1, keepdims=True)       # (TM, 1)
    # torch CosineSimilarity: dot / max(||q||*||k||, eps)  (product clamp), then /temp.
    pos_logit = pos_dot * inv_t * lax.rsqrt(jnp.maximum(q_sq * km_sq, _EPS * _EPS))

    # ---- negative logits: pre-normalized operands, one canonical MXU dot ----
    # Keys were normalized/transposed/cast once in the wrapper (per-operand eps
    # clamp; differs from torch's product clamp only for near-zero-norm rows).
    q_hat = (q * (inv_t * lax.rsqrt(jnp.maximum(q_sq, _EPS * _EPS)))).astype(mm_dtype)
    logits = lax.dot_general(
        q_hat, khat_ref[...], (((1,), (0,)), ((), ())),
        preferred_element_type=jnp.float32,
        precision=(lax.Precision.HIGHEST if hi_prec else None))   # (TM, Bp)

    # Diagonal of l_neg -> -10 (temperature already folded in).  One full-width
    # iota + compare + select; row ids are a cheap (TM, 1) column.
    col = lax.broadcasted_iota(jnp.int32, (tm, bp), 1)
    row_ids = row0 + lax.broadcasted_iota(jnp.int32, (tm, 1), 0)
    logits = jnp.where(col == row_ids, _NEG_FILL * inv_t, logits)

    # ---- cross-entropy with target class 0 over [pos_logit, logits] ---------
    m = jnp.maximum(jnp.max(logits, axis=-1, keepdims=True), pos_logit)
    sumexp = (jnp.sum(jnp.exp(logits - m), axis=-1, keepdims=True)
              + jnp.exp(pos_logit - m))
    if bp > b_actual:
        # Padded key columns have exactly-zero logits (zero-padded normalized
        # keys), so each contributed exp(0 - m); subtract them instead of
        # masking the full (TM, Bp) tile.  (m >= 0 here, so exp(-m) <= 1.)
        sumexp = sumexp - (bp - b_actual) * jnp.exp(-m)
    loss_ref[...] = (m + jnp.log(sumexp) - pos_logit).astype(loss_ref.dtype)


def _build_call(kernel, bp, dp, tm, vmem_limit, single_buffer_k):
    khat_kwargs = {}
    if single_buffer_k:
        # Resident operand whose block index never changes: one buffer suffices.
        khat_kwargs["pipeline_mode"] = pl.Buffered(1)
    grid_spec = pltpu.PrefetchScalarGridSpec(
        num_scalar_prefetch=0,
        grid=(bp // tm,),
        in_specs=[
            pl.BlockSpec((tm, dp), lambda i: (i, 0)),                 # q: row tiles, pipelined
            pl.BlockSpec((tm, dp), lambda i: (i, 0)),                 # matching k rows (positives)
            pl.BlockSpec((dp, bp), lambda i: (0, 0), **khat_kwargs),  # normalized keys, resident
        ],
        out_specs=pl.BlockSpec((tm, 1), lambda i: (i, 0)),
    )
    return pl.pallas_call(
        kernel,
        out_shape=jax.ShapeDtypeStruct((bp, 1), jnp.float32),
        grid_spec=grid_spec,
        compiler_params=pltpu.CompilerParams(
            dimension_semantics=("parallel",),
            vmem_limit_bytes=int(vmem_limit)),
    )


def patch_nce_loss(feat_q, feat_k, *, mm_dtype=jnp.bfloat16):
    """feat_q, feat_k: (B, D) arrays. Returns the per-sample PatchNCE loss (B,)."""
    assert feat_q.ndim == 2 and feat_q.shape == feat_k.shape
    b, d = feat_q.shape
    bp, dp = _round_up(b, 128), _round_up(d, 128)
    if (bp, dp) != (b, d):
        # Zero padding: padded key columns are handled exactly inside the
        # kernel; padded query rows are sliced off below.
        feat_q = jnp.pad(feat_q, ((0, bp - b), (0, dp - d)))
        feat_k = jnp.pad(feat_k, ((0, bp - b), (0, dp - d)))

    # One-time key normalization + transpose + cast (review opts #1/#2/#7).
    # Doing it here (one tiny O(B*D) XLA op) instead of in-kernel avoids
    # redoing it on every grid step and halves the resident key bytes.
    kf = feat_k.astype(jnp.float32)
    k_inv = lax.rsqrt(jnp.maximum(jnp.sum(kf * kf, axis=-1, keepdims=True), _EPS * _EPS))
    k_hat = (kf * k_inv).T.astype(mm_dtype)          # (Dp, Bp): contraction dim leading

    in_itemsize = jnp.dtype(feat_q.dtype).itemsize
    mm_itemsize = jnp.dtype(mm_dtype).itemsize
    budget = (_vmem_capacity_bytes() * 3) // 4       # ~96 MiB on v5e/v6e, ~48 MiB on v7x
    tm = _choose_tm(bp, dp, in_itemsize, mm_itemsize, budget)
    est = _vmem_estimate(tm, bp, dp, in_itemsize, mm_itemsize)
    vmem_limit = min(max(est * 5 // 4, 32 << 20), budget)

    kernel = partial(_patch_nce_kernel, b_actual=b, mm_dtype=mm_dtype,
                     hi_prec=(jnp.dtype(mm_dtype) == jnp.dtype(jnp.float32)))
    try:
        call = _build_call(kernel, bp, dp, tm, vmem_limit, single_buffer_k=True)
        out = jax.block_until_ready(call(feat_q, feat_k, k_hat))
    except Exception:
        # pl.Buffered(1) not accepted by this JAX/Mosaic build: fall back to
        # the default double-buffered resident key spec (correctness identical).
        call = _build_call(kernel, bp, dp, tm, vmem_limit, single_buffer_k=False)
        out = jax.block_until_ready(call(feat_q, feat_k, k_hat))
    return out[:b, 0]


def _reference(feat_q, feat_k):
    """Pure-JAX reference mirroring the PyTorch module (matmul-free so it is
    independent of the TPU MXU default matmul precision)."""
    q = feat_q.astype(jnp.float32)
    k = feat_k.astype(jnp.float32)
    sim = jnp.sum(q[:, None, :] * k[None, :, :], axis=-1)
    qn = jnp.linalg.norm(q, axis=-1)
    kn = jnp.linalg.norm(k, axis=-1)
    sim = sim / jnp.maximum(qn[:, None] * kn[None, :], _EPS)
    l_pos = jnp.diagonal(sim)[:, None]
    l_neg = jnp.where(jnp.eye(q.shape[0], dtype=bool), _NEG_FILL, sim)
    logits = jnp.concatenate([l_pos, l_neg], axis=1) / _TEMP
    return jax.nn.logsumexp(logits, axis=-1) - logits[:, 0]


if __name__ == "__main__":
    key = jax.random.PRNGKey(0)
    k1, k2, k3, k4 = jax.random.split(key, 4)

    # Case 1: tiny toy shapes consistent with the module (B patches, D feats).
    fq1 = jax.random.normal(k1, (8, 32), dtype=jnp.float32)
    fk1 = jax.random.normal(k2, (8, 32), dtype=jnp.float32)

    # Case 2: un-aligned B/D -> exercises padding (exact sumexp correction),
    # a multi-tile grid and the global-row diagonal offset (B=300 -> Bp=384,
    # three 128-row tiles).
    fq2 = jax.random.normal(k3, (300, 64), dtype=jnp.float32)
    fk2 = jax.random.normal(k4, (300, 64), dtype=jnp.float32)

    for fq, fk in ((fq1, fk1), (fq2, fk2)):
        ref = _reference(fq, fk)
        # Default fast path: bf16 MXU operands, f32 accumulate.  Tolerance
        # covers worst-case bf16 operand rounding (|logit err| <~ 0.06).
        loss = jax.block_until_ready(patch_nce_loss(fq, fk))
        assert loss.shape == (fq.shape[0],)
        assert bool(jnp.all(jnp.isfinite(loss)))
        assert jnp.allclose(loss, ref, atol=1e-1, rtol=3e-2), \
            float(jnp.max(jnp.abs(loss - ref)))

    print("KERNEL_OK")
</pallas_src>

<mosaic_0001>
module attributes {stable_mosaic.version = 11 : i64} {
  func.func @_patch_nce_kernel(%arg0: i32, %arg1: memref<128x128xf32, #tpu.memory_space<vmem>>, %arg2: memref<128x128xf32, #tpu.memory_space<vmem>>, %arg3: memref<128x128xbf16, #tpu.memory_space<vmem>>, %arg4: memref<128x1xf32, #tpu.memory_space<vmem>>) attributes {dimension_semantics = [#tpu.dimension_semantics<parallel>], iteration_bounds = array<i64: 1>, scalar_prefetch = 0 : i64, scratch_operands = 0 : i64, tpu.core_type = #tpu.core_type<tc>, window_params = [{transform_indices = @transform_0, window_bounds = array<i64: 128, 128>}, {transform_indices = @transform_1, window_bounds = array<i64: 128, 128>}, {pipeline_mode = #tpu.pipeline_mode<synchronous>, transform_indices = @transform_2, window_bounds = array<i64: 128, 128>}, {transform_indices = @transform_3, window_bounds = array<i64: 128, 1>}]} {
    %c128_i32 = arith.constant 128 : i32
    %0 = arith.muli %arg0, %c128_i32 : i32
    %1 = tpu.assume_multiple %0, 128 : i32
    %c0 = arith.constant 0 : index
    %c0_0 = arith.constant 0 : index
    %2 = vector.load %arg1[%c0, %c0_0] : memref<128x128xf32, #tpu.memory_space<vmem>>, vector<128x128xf32>
    %c0_1 = arith.constant 0 : index
    %c0_2 = arith.constant 0 : index
    %3 = vector.load %arg2[%c0_1, %c0_2] : memref<128x128xf32, #tpu.memory_space<vmem>>, vector<128x128xf32>
    %4 = arith.mulf %2, %2 : vector<128x128xf32>
    %cst = arith.constant dense<0.000000e+00> : vector<128xf32>
    %5 = vector.multi_reduction <add>, %4, %cst [1] : vector<128x128xf32> to vector<128xf32>
    %6 = vector.shape_cast %5 : vector<128xf32> to vector<128x1xf32>
    %7 = arith.mulf %3, %3 : vector<128x128xf32>
    %cst_3 = arith.constant dense<0.000000e+00> : vector<128xf32>
    %8 = vector.multi_reduction <add>, %7, %cst_3 [1] : vector<128x128xf32> to vector<128xf32>
    %9 = vector.shape_cast %8 : vector<128xf32> to vector<128x1xf32>
    %10 = arith.mulf %2, %3 : vector<128x128xf32>
    %cst_4 = arith.constant dense<0.000000e+00> : vector<128xf32>
    %11 = vector.multi_reduction <add>, %10, %cst_4 [1] : vector<128x128xf32> to vector<128xf32>
    %12 = vector.shape_cast %11 : vector<128xf32> to vector<128x1xf32>
    %cst_5 = arith.constant 14.2857141 : f32
    %13 = vector.broadcast %cst_5 : f32 to vector<128x1xf32>
    %14 = arith.mulf %12, %13 : vector<128x1xf32>
    %15 = arith.mulf %6, %9 : vector<128x1xf32>
    %cst_6 = arith.constant 1.000000e-16 : f32
    %16 = vector.broadcast %cst_6 : f32 to vector<128x1xf32>
    %17 = arith.maximumf %15, %16 : vector<128x1xf32>
    %18 = math.rsqrt %17 : vector<128x1xf32>
    %19 = arith.mulf %14, %18 : vector<128x1xf32>
    %cst_7 = arith.constant 1.000000e-16 : f32
    %20 = vector.broadcast %cst_7 : f32 to vector<128x1xf32>
    %21 = arith.maximumf %6, %20 : vector<128x1xf32>
    %22 = math.rsqrt %21 : vector<128x1xf32>
    %cst_8 = arith.constant 14.2857141 : f32
    %23 = vector.broadcast %cst_8 : f32 to vector<128x1xf32>
    %24 = arith.mulf %23, %22 : vector<128x1xf32>
    %25 = vector.broadcast %24 : vector<128x1xf32> to vector<128x128xf32>
    %26 = arith.mulf %2, %25 : vector<128x128xf32>
    %27 = arith.truncf %26 : vector<128x128xf32> to vector<128x128xbf16>
    %c0_9 = arith.constant 0 : index
    %c0_10 = arith.constant 0 : index
    %28 = vector.load %arg3[%c0_9, %c0_10] : memref<128x128xbf16, #tpu.memory_space<vmem>>, vector<128x128xbf16>
    %cst_11 = arith.constant dense<0.000000e+00> : vector<128x128xf32>
    %29 = tpu.matmul %27, %28, %cst_11 {dimension_numbers = #tpu.dot_dimension_numbers<[1], [0], [0], [1], [0, 0, 1, 1], [], []>} : vector<128x128xbf16>, vector<128x128xbf16>, vector<128x128xf32> -> vector<128x128xf32>
    %30 = tpu.iota {dimensions = array<i32: 1>} : vector<128x128xi32>
    %31 = tpu.iota {dimensions = array<i32: 0>} : vector<128x1xi32>
    %32 = vector.broadcast %1 : i32 to vector<128x1xi32>
    %33 = arith.addi %32, %31 : vector<128x1xi32>
    %34 = vector.broadcast %33 : vector<128x1xi32> to vector<128x128xi32>
    %35 = arith.cmpi eq, %30, %34 : vector<128x128xi32>
    %cst_12 = arith.constant -142.857147 : f32
    %36 = vector.broadcast %cst_12 : f32 to vector<128x128xf32>
    %37 = arith.select %35, %36, %29 : vector<128x128xi1>, vector<128x128xf32>
    %cst_13 = arith.constant dense<0xFF800000> : vector<128xf32>
    %38 = vector.multi_reduction <maximumf>, %37, %cst_13 [1] : vector<128x128xf32> to vector<128xf32>
    %39 = vector.shape_cast %38 : vector<128xf32> to vector<128x1xf32>
    %40 = arith.maximumf %39, %19 : vector<128x1xf32>
    %41 = vector.broadcast %40 : vector<128x1xf32> to vector<128x128xf32>
    %42 = arith.subf %37, %41 : vector<128x128xf32>
    %43 = math.exp %42 : vector<128x128xf32>
    %cst_14 = arith.constant dense<0.000000e+00> : vector<128xf32>
    %44 = vector.multi_reduction <add>, %43, %cst_14 [1] : vector<128x128xf32> to vector<128xf32>
    %45 = vector.shape_cast %44 : vector<128xf32> to vector<128x1xf32>
    %46 = arith.subf %19, %40 : vector<128x1xf32>
    %47 = math.exp %46 : vector<128x1xf32>
    %48 = arith.addf %45, %47 : vector<128x1xf32>
    %cst_15 = arith.constant 0.000000e+00 : f32
    %49 = vector.broadcast %cst_15 : f32 to vector<128x1xf32>
    %50 = arith.subf %49, %40 : vector<128x1xf32>
    %51 = math.exp %50 : vector<128x1xf32>
    %cst_16 = arith.constant 1.200000e+02 : f32
    %52 = vector.broadcast %cst_16 : f32 to vector<128x1xf32>
    %53 = arith.mulf %52, %51 : vector<128x1xf32>
    %54 = arith.subf %48, %53 : vector<128x1xf32>
    %55 = math.log %54 : vector<128x1xf32>
    %56 = arith.addf %40, %55 : vector<128x1xf32>
    %57 = arith.subf %56, %19 : vector<128x1xf32>
    %c0_17 = arith.constant 0 : index
    %c0_18 = arith.constant 0 : index
    %58 = vector.load %arg4[%c0_17, %c0_18] : memref<128x1xf32, #tpu.memory_space<vmem>>, vector<128x1xf32>
    tpu.vector_store %arg4[%c0_17, %c0_18], %57 {strides = array<i32>} : memref<128x1xf32, #tpu.memory_space<vmem>>, vector<128x1xf32>,
    return
  }
  func.func @transform_0(%arg0: i32) -> (i32, i32) {
    %c0_i32 = arith.constant 0 : i32
    %c0_i32_0 = arith.constant 0 : i32
    return %arg0, %c0_i32 : i32, i32
  }
  func.func @transform_1(%arg0: i32) -> (i32, i32) {
    %c0_i32 = arith.constant 0 : i32
    %c0_i32_0 = arith.constant 0 : i32
    return %arg0, %c0_i32 : i32, i32
  }
  func.func @transform_2(%arg0: i32) -> (i32, i32) {
    %c0_i32 = arith.constant 0 : i32
    %c0_i32_0 = arith.constant 0 : i32
    %c0_i32_1 = arith.constant 0 : i32
    return %c0_i32, %c0_i32_0 : i32, i32
  }
  func.func @transform_3(%arg0: i32) -> (i32, i32) {
    %c0_i32 = arith.constant 0 : i32
    %c0_i32_0 = arith.constant 0 : i32
    return %arg0, %c0_i32 : i32, i32
  }
}

module attributes {stable_mosaic.version = 11 : i64} {
  func.func @_patch_nce_kernel(%arg0: i32, %arg1: memref<128x128xf32, #tpu.memory_space<vmem>>, %arg2: memref<128x128xf32, #tpu.memory_space<vmem>>, %arg3: memref<128x128xbf16, #tpu.memory_space<vmem>>, %arg4: memref<128x1xf32, #tpu.memory_space<vmem>>) attributes {dimension_semantics = [#tpu.dimension_semantics<parallel>], iteration_bounds = array<i64: 1>, scalar_prefetch = 0 : i64, scratch_operands = 0 : i64, tpu.core_type = #tpu.core_type<tc>, window_params = [{transform_indices = @transform_0, window_bounds = array<i64: 128, 128>}, {transform_indices = @transform_1, window_bounds = array<i64: 128, 128>}, {pipeline_mode = #tpu.pipeline_mode<synchronous>, transform_indices = @transform_2, window_bounds = array<i64: 128, 128>}, {transform_indices = @transform_3, window_bounds = array<i64: 128, 1>}]} {
    %c128_i32 = arith.constant 128 : i32
    %0 = arith.muli %arg0, %c128_i32 : i32
    %1 = tpu.assume_multiple %0, 128 : i32
    %c0 = arith.constant 0 : index
    %c0_0 = arith.constant 0 : index
    %2 = vector.load %arg1[%c0, %c0_0] : memref<128x128xf32, #tpu.memory_space<vmem>>, vector<128x128xf32>
    %c0_1 = arith.constant 0 : index
    %c0_2 = arith.constant 0 : index
    %3 = vector.load %arg2[%c0_1, %c0_2] : memref<128x128xf32, #tpu.memory_space<vmem>>, vector<128x128xf32>
    %4 = arith.mulf %2, %2 : vector<128x128xf32>
    %cst = arith.constant dense<0.000000e+00> : vector<128xf32>
    %5 = vector.multi_reduction <add>, %4, %cst [1] : vector<128x128xf32> to vector<128xf32>
    %6 = vector.shape_cast %5 : vector<128xf32> to vector<128x1xf32>
    %7 = arith.mulf %3, %3 : vector<128x128xf32>
    %cst_3 = arith.constant dense<0.000000e+00> : vector<128xf32>
    %8 = vector.multi_reduction <add>, %7, %cst_3 [1] : vector<128x128xf32> to vector<128xf32>
    %9 = vector.shape_cast %8 : vector<128xf32> to vector<128x1xf32>
    %10 = arith.mulf %2, %3 : vector<128x128xf32>
    %cst_4 = arith.constant dense<0.000000e+00> : vector<128xf32>
    %11 = vector.multi_reduction <add>, %10, %cst_4 [1] : vector<128x128xf32> to vector<128xf32>
    %12 = vector.shape_cast %11 : vector<128xf32> to vector<128x1xf32>
    %cst_5 = arith.constant 14.2857141 : f32
    %13 = vector.broadcast %cst_5 : f32 to vector<128x1xf32>
    %14 = arith.mulf %12, %13 : vector<128x1xf32>
    %15 = arith.mulf %6, %9 : vector<128x1xf32>
    %cst_6 = arith.constant 1.000000e-16 : f32
    %16 = vector.broadcast %cst_6 : f32 to vector<128x1xf32>
    %17 = arith.maximumf %15, %16 : vector<128x1xf32>
    %18 = math.rsqrt %17 : vector<128x1xf32>
    %19 = arith.mulf %14, %18 : vector<128x1xf32>
    %cst_7 = arith.constant 1.000000e-16 : f32
    %20 = vector.broadcast %cst_7 : f32 to vector<128x1xf32>
    %21 = arith.maximumf %6, %20 : vector<128x1xf32>
    %22 = math.rsqrt %21 : vector<128x1xf32>
    %cst_8 = arith.constant 14.2857141 : f32
    %23 = vector.broadcast %cst_8 : f32 to vector<128x1xf32>
    %24 = arith.mulf %23, %22 : vector<128x1xf32>
    %25 = vector.broadcast %24 : vector<128x1xf32> to vector<128x128xf32>
    %26 = arith.mulf %2, %25 : vector<128x128xf32>
    %27 = arith.truncf %26 : vector<128x128xf32> to vector<128x128xbf16>
    %c0_9 = arith.constant 0 : index
    %c0_10 = arith.constant 0 : index
    %28 = vector.load %arg3[%c0_9, %c0_10] : memref<128x128xbf16, #tpu.memory_space<vmem>>, vector<128x128xbf16>
    %cst_11 = arith.constant dense<0.000000e+00> : vector<128x128xf32>
    %29 = tpu.matmul %27, %28, %cst_11 {dimension_numbers = #tpu.dot_dimension_numbers<[1], [0], [0], [1], [0, 0, 1, 1], [], []>} : vector<128x128xbf16>, vector<128x128xbf16>, vector<128x128xf32> -> vector<128x128xf32>
    %30 = tpu.iota {dimensions = array<i32: 1>} : vector<128x128xi32>
    %31 = tpu.iota {dimensions = array<i32: 0>} : vector<128x1xi32>
    %32 = vector.broadcast %1 : i32 to vector<128x1xi32>
    %33 = arith.addi %32, %31 : vector<128x1xi32>
    %34 = vector.broadcast %33 : vector<128x1xi32> to vector<128x128xi32>
    %35 = arith.cmpi eq, %30, %34 : vector<128x128xi32>
    %cst_12 = arith.constant -142.857147 : f32
    %36 = vector.broadcast %cst_12 : f32 to vector<128x128xf32>
    %37 = arith.select %35, %36, %29 : vector<128x128xi1>, vector<128x128xf32>
    %cst_13 = arith.constant dense<0xFF800000> : vector<128xf32>
    %38 = vector.multi_reduction <maximumf>, %37, %cst_13 [1] : vector<128x128xf32> to vector<128xf32>
    %39 = vector.shape_cast %38 : vector<128xf32> to vector<128x1xf32>
    %40 = arith.maximumf %39, %19 : vector<128x1xf32>
    %41 = vector.broadcast %40 : vector<128x1xf32> to vector<128x128xf32>
    %42 = arith.subf %37, %41 : vector<128x128xf32>
    %43 = math.exp %42 : vector<128x128xf32>
    %cst_14 = arith.constant dense<0.000000e+00> : vector<128xf32>
    %44 = vector.multi_reduction <add>, %43, %cst_14 [1] : vector<128x128xf32> to vector<128xf32>
    %45 = vector.shape_cast %44 : vector<128xf32> to vector<128x1xf32>
    %46 = arith.subf %19, %40 : vector<128x1xf32>
    %47 = math.exp %46 : vector<128x1xf32>
    %48 = arith.addf %45, %47 : vector<128x1xf32>
    %cst_15 = arith.constant 0.000000e+00 : f32
    %49 = vector.broadcast %cst_15 : f32 to vector<128x1xf32>
    %50 = arith.subf %49, %40 : vector<128x1xf32>
    %51 = math.exp %50 : vector<128x1xf32>
    %cst_16 = arith.constant 1.200000e+02 : f32
    %52 = vector.broadcast %cst_16 : f32 to vector<128x1xf32>
    %53 = arith.mulf %52, %51 : vector<128x1xf32>
    %54 = arith.subf %48, %53 : vector<128x1xf32>
    %55 = math.log %54 : vector<128x1xf32>
    %56 = arith.addf %40, %55 : vector<128x1xf32>
    %57 = arith.subf %56, %19 : vector<128x1xf32>
    %c0_17 = arith.constant 0 : index
    %c0_18 = arith.constant 0 : index
    %58 = vector.load %arg4[%c0_17, %c0_18] : memref<128x1xf32, #tpu.memory_space<vmem>>, vector<128x1xf32>
    tpu.vector_store %arg4[%c0_17, %c0_18], %57 {strides = array<i32>} : memref<128x1xf32, #tpu.memory_space<vmem>>, vector<128x1xf32>,
    return
  }
  func.func @transform_0(%arg0: i32) -> (i32, i32) {
    %c0_i32 = arith.constant 0 : i32
    %c0_i32_0 = arith.constant 0 : i32
    return %arg0, %c0_i32 : i32, i32
  }
  func.func @transform_1(%arg0: i32) -> (i32, i32) {
    %c0_i32 = arith.constant 0 : i32
    %c0_i32_0 = arith.constant 0 : i32
    return %arg0, %c0_i32 : i32, i32
  }
  func.func @transform_2(%arg0: i32) -> (i32, i32) {
    %c0_i32 = arith.constant 0 : i32
    %c0_i32_0 = arith.constant 0 : i32
    %c0_i32_1 = arith.constant 0 : i32
    return %c0_i32, %c0_i32_0 : i32, i32
  }
  func.func @transform_3(%arg0: i32) -> (i32, i32) {
    %c0_i32 = arith.constant 0 : i32
    %c0_i32_0 = arith.constant 0 : i32
    return %arg0, %c0_i32 : i32, i32
  }
}

</mosaic_0001>

<llo_original>
// kernel: tpu_custom_call.1
$region0: #{tpu_custom_call.1}
  #allocation0 [shape = 'u32[]', space=smem, size = 0x4, offset = 0x4, fixed_abs, tag = 'smem constant byte address 0x4 - core index']
  #allocation1 [shape = 'u32[144,128]{1,0:T(1,128)}', space=vmem, size = 0x12000, scoped, tag = 'internal scratch']
  %s0 = inlined_call_operand.hbm [shape: f32[128,128], index: 0, kind: input, shape index: {}]
  %s1 = inlined_call_operand.hbm [shape: f32[128,128], index: 1, kind: input, shape index: {}]
  %s2 = inlined_call_operand.hbm [shape: bf16[128,128], index: 2, kind: input, shape index: {}]
  %s3 = inlined_call_operand.vmem [shape: f32[128,1], index: 3, kind: output, shape index: {}]
  %s4 = sld [smem:[#allocation0]]
  $region34: #{tpu_custom_call.1} parent=0
    _
  %s6 = ssub.s32 1, %s4
  %s7 = scalar_select 0, %s6, %s4
  $region1: #{tpu_custom_call.1} parent=0
    #allocation2 [shape = 'u8[65536]{0}', space=vmem, size = 0x10000, scoped, tag = 'input window, operand 0, single buffered']
    #allocation3 [shape = 's32[1]{0}', space=sflag, size = 0x4, scoped, tag = 'scoped memory for tpu_custom_call.1']
    #allocation4 [shape = 'u8[65536]{0}', space=vmem, size = 0x10000, scoped, tag = 'input window, operand 1, single buffered']
    #allocation5 [shape = 's32[1]{0}', space=sflag, size = 0x4, scoped, tag = 'scoped memory for tpu_custom_call.1']
    #allocation6 [shape = 'u8[32768]{0}', space=vmem, size = 0x8000, scoped, tag = 'input window, operand 2, single buffered']
    %8 = vsyncpa [#allocation3], 0
    %9 = vsyncpa [#allocation5], 0
    // Predicated region
    $region2: #{tpu_custom_call.1} parent=1 // pred_check
      _
    $region3: #{tpu_custom_call.1} parent=1 // pred_check_branch
      %11 = sbr.rel (0) target = $region5
    $region4: #{tpu_custom_call.1} parent=1 // pred_region
      %s13 = ssub.s32 2048, 2048
      %14 = vsyncadd [#allocation3], %s13
      %s15 = sshll.u32 [#allocation2], 4
      %s16 = int_to_ptr.vmem [resolvable:$true] %s15
      %21 = dma.hbm_to_vmem [thread:$0]  %s0, 2048, %s16, [#allocation3], 128, 128, 8
    $region5: #{tpu_custom_call.1} parent=1 // pred_fallthru
      _
    // Predicated region
    $region6: #{tpu_custom_call.1} parent=1 // pred_check
      _
    $region7: #{tpu_custom_call.1} parent=1 // pred_check_branch
      %23 = sbr.rel (0) target = $region9
    $region8: #{tpu_custom_call.1} parent=1 // pred_region
      %s25 = ssub.s32 2048, 2048
      %26 = vsyncadd [#allocation5], %s25
      %s27 = sshll.u32 [#allocation4], 4
      %s28 = int_to_ptr.vmem [resolvable:$true] %s27
      %33 = dma.hbm_to_vmem [thread:$0]  %s1, 2048, %s28, [#allocation5], 128, 128, 8
    $region9: #{tpu_custom_call.1} parent=1 // pred_fallthru
      _
    // Predicated region
    $region10: #{tpu_custom_call.1} parent=1 // pred_check
      _
    $region11: #{tpu_custom_call.1} parent=1 // pred_check_branch
      %35 = sbr.rel (0) target = $region13
    $region12: #{tpu_custom_call.1} parent=1 // pred_region
      %s37 = ssub.s32 1024, 1024
      %38 = vsyncadd [#allocation5], %s37
      %s39 = sshll.u32 [#allocation6], 4
      %s40 = int_to_ptr.vmem [resolvable:$true] %s39
      %45 = dma.hbm_to_vmem [thread:$0]  %s2, 1024, %s40, [#allocation5], 64, 64, 4
    $region13: #{tpu_custom_call.1} parent=1 // pred_fallthru
      _
    // Predicated region
    $region14: #{tpu_custom_call.1} parent=1 // pred_check
      _
    $region15: #{tpu_custom_call.1} parent=1 // pred_check_branch
      %47 = sbr.rel (0) target = $region17
    $region16: #{tpu_custom_call.1} parent=1 // pred_region
      %48 = dma.done [#allocation3], 2048
    $region17: #{tpu_custom_call.1} parent=1 // pred_fallthru
      _
    // Predicated region
    $region18: #{tpu_custom_call.1} parent=1 // pred_check
      _
    $region19: #{tpu_custom_call.1} parent=1 // pred_check_branch
      %50 = sbr.rel (0) target = $region21
    $region20: #{tpu_custom_call.1} parent=1 // pred_region
      %51 = dma.done [#allocation5], 2048
    $region21: #{tpu_custom_call.1} parent=1 // pred_fallthru
      _
    // Predicated region
    $region22: #{tpu_custom_call.1} parent=1 // pred_check
      _
    $region23: #{tpu_custom_call.1} parent=1 // pred_check_branch
      %53 = sbr.rel (0) target = $region25
    $region24: #{tpu_custom_call.1} parent=1 // pred_region
      %54 = dma.done [#allocation5], 1024
    $region25: #{tpu_custom_call.1} parent=1 // pred_fallthru
      _
    %s56 = smul.u32 0, 128
    %v57 = vld [vmem:[#allocation2] sm:$0xff]
    %v58 = vld [vmem:[#allocation2 + $0x8] sm:$0xff]
    %v59 = vld [vmem:[#allocation2 + $0x10] sm:$0xff]
    %v60 = vld [vmem:[#allocation2 + $0x18] sm:$0xff]
    %v61 = vld [vmem:[#allocation2 + $0x20] sm:$0xff]
    %v62 = vld [vmem:[#allocation2 + $0x28] sm:$0xff]
    %v63 = vld [vmem:[#allocation2 + $0x30] sm:$0xff]
    %v64 = vld [vmem:[#allocation2 + $0x38] sm:$0xff]
    %v65 = vld [vmem:[#allocation2 + $0x40] sm:$0xff]
    %v66 = vld [vmem:[#allocation2 + $0x48] sm:$0xff]
    %v67 = vld [vmem:[#allocation2 + $0x50] sm:$0xff]
    %v68 = vld [vmem:[#allocation2 + $0x58] sm:$0xff]
    %v69 = vld [vmem:[#allocation2 + $0x60] sm:$0xff]
    %v70 = vld [vmem:[#allocation2 + $0x68] sm:$0xff]
    %v71 = vld [vmem:[#allocation2 + $0x70] sm:$0xff]
    %v72 = vld [vmem:[#allocation2 + $0x78] sm:$0xff]
    %v73 = vld [vmem:[#allocation4] sm:$0xff]
    %v74 = vld [vmem:[#allocation4 + $0x8] sm:$0xff]
    %v75 = vld [vmem:[#allocation4 + $0x10] sm:$0xff]
    %v76 = vld [vmem:[#allocation4 + $0x18] sm:$0xff]
    %v77 = vld [vmem:[#allocation4 + $0x20] sm:$0xff]
    %v78 = vld [vmem:[#allocation4 + $0x28] sm:$0xff]
    %v79 = vld [vmem:[#allocation4 + $0x30] sm:$0xff]
    %v80 = vld [vmem:[#allocation4 + $0x38] sm:$0xff]
    %v81 = vld [vmem:[#allocation4 + $0x40] sm:$0xff]
    %v82 = vld [vmem:[#allocation4 + $0x48] sm:$0xff]
    %v83 = vld [vmem:[#allocation4 + $0x50] sm:$0xff]
    %v84 = vld [vmem:[#allocation4 + $0x58] sm:$0xff]
    %v85 = vld [vmem:[#allocation4 + $0x60] sm:$0xff]
    %v86 = vld [vmem:[#allocation4 + $0x68] sm:$0xff]
    %v87 = vld [vmem:[#allocation4 + $0x70] sm:$0xff]
    %v88 = vld [vmem:[#allocation4 + $0x78] sm:$0xff]
    %v89 = vmul.f32 %v57, %v57
    %v90 = vmul.f32 %v58, %v58
    %v91 = vmul.f32 %v59, %v59
    %v92 = vmul.f32 %v60, %v60
    %v93 = vmul.f32 %v61, %v61
    %v94 = vmul.f32 %v62, %v62
    %v95 = vmul.f32 %v63, %v63
    %v96 = vmul.f32 %v64, %v64
    %v97 = vmul.f32 %v65, %v65
    %v98 = vmul.f32 %v66, %v66
    %v99 = vmul.f32 %v67, %v67
    %v100 = vmul.f32 %v68, %v68
    %v101 = vmul.f32 %v69, %v69
    %v102 = vmul.f32 %v70, %v70
    %v103 = vmul.f32 %v71, %v71
    %v104 = vmul.f32 %v72, %v72
    %105 = vadd.xlane.f32.xlu0 %v89
    %v106 = vpop.xlane.xlu0 %105
    %107 = vadd.xlane.f32.xlu0 %v90
    %v108 = vpop.xlane.xlu0 %107
    %109 = vadd.xlane.f32.xlu0 %v91
    %v110 = vpop.xlane.xlu0 %109
    %111 = vadd.xlane.f32.xlu0 %v92
    %v112 = vpop.xlane.xlu0 %111
    %113 = vadd.xlane.f32.xlu0 %v93
    %v114 = vpop.xlane.xlu0 %113
    %115 = vadd.xlane.f32.xlu0 %v94
    %v116 = vpop.xlane.xlu0 %115
    %117 = vadd.xlane.f32.xlu0 %v95
    %v118 = vpop.xlane.xlu0 %117
    %119 = vadd.xlane.f32.xlu0 %v96
    %v120 = vpop.xlane.xlu0 %119
    %121 = vadd.xlane.f32.xlu0 %v97
    %v122 = vpop.xlane.xlu0 %121
    %123 = vadd.xlane.f32.xlu0 %v98
    %v124 = vpop.xlane.xlu0 %123
    %125 = vadd.xlane.f32.xlu0 %v99
    %v126 = vpop.xlane.xlu0 %125
    %127 = vadd.xlane.f32.xlu0 %v100
    %v128 = vpop.xlane.xlu0 %127
    %129 = vadd.xlane.f32.xlu0 %v101
    %v130 = vpop.xlane.xlu0 %129
    %131 = vadd.xlane.f32.xlu0 %v102
    %v132 = vpop.xlane.xlu0 %131
    %133 = vadd.xlane.f32.xlu0 %v103
    %v134 = vpop.xlane.xlu0 %133
    %135 = vadd.xlane.f32.xlu0 %v104
    %v136 = vpop.xlane.xlu0 %135
    %v137 = vmul.f32 %v73, %v73
    %v138 = vmul.f32 %v74, %v74
    %v139 = vmul.f32 %v75, %v75
    %v140 = vmul.f32 %v76, %v76
    %v141 = vmul.f32 %v77, %v77
    %v142 = vmul.f32 %v78, %v78
    %v143 = vmul.f32 %v79, %v79
    %v144 = vmul.f32 %v80, %v80
    %v145 = vmul.f32 %v81, %v81
    %v146 = vmul.f32 %v82, %v82
    %v147 = vmul.f32 %v83, %v83
    %v148 = vmul.f32 %v84, %v84
    %v149 = vmul.f32 %v85, %v85
    %v150 = vmul.f32 %v86, %v86
    %v151 = vmul.f32 %v87, %v87
    %v152 = vmul.f32 %v88, %v88
    %153 = vadd.xlane.f32.xlu0 %v137
    %v154 = vpop.xlane.xlu0 %153
    %155 = vadd.xlane.f32.xlu0 %v138
    %v156 = vpop.xlane.xlu0 %155
    %157 = vadd.xlane.f32.xlu0 %v139
    %v158 = vpop.xlane.xlu0 %157
    %159 = vadd.xlane.f32.xlu0 %v140
    %v160 = vpop.xlane.xlu0 %159
    %161 = vadd.xlane.f32.xlu0 %v141
    %v162 = vpop.xlane.xlu0 %161
    %163 = vadd.xlane.f32.xlu0 %v142
    %v164 = vpop.xlane.xlu0 %163
    %165 = vadd.xlane.f32.xlu0 %v143
    %v166 = vpop.xlane.xlu0 %165
    %167 = vadd.xlane.f32.xlu0 %v144
    %v168 = vpop.xlane.xlu0 %167
    %169 = vadd.xlane.f32.xlu0 %v145
    %v170 = vpop.xlane.xlu0 %169
    %171 = vadd.xlane.f32.xlu0 %v146
    %v172 = vpop.xlane.xlu0 %171
    %173 = vadd.xlane.f32.xlu0 %v147
    %v174 = vpop.xlane.xlu0 %173
    %175 = vadd.xlane.f32.xlu0 %v148
    %v176 = vpop.xlane.xlu0 %175
    %177 = vadd.xlane.f32.xlu0 %v149
    %v178 = vpop.xlane.xlu0 %177
    %179 = vadd.xlane.f32.xlu0 %v150
    %v180 = vpop.xlane.xlu0 %179
    %181 = vadd.xlane.f32.xlu0 %v151
    %v182 = vpop.xlane.xlu0 %181
    %183 = vadd.xlane.f32.xlu0 %v152
    %v184 = vpop.xlane.xlu0 %183
    %v185 = vmul.f32 %v57, %v73
    %v186 = vmul.f32 %v58, %v74
    %v187 = vmul.f32 %v59, %v75
    %v188 = vmul.f32 %v60, %v76
    %v189 = vmul.f32 %v61, %v77
    %v190 = vmul.f32 %v62, %v78
    %v191 = vmul.f32 %v63, %v79
    %v192 = vmul.f32 %v64, %v80
    %v193 = vmul.f32 %v65, %v81
    %v194 = vmul.f32 %v66, %v82
    %v195 = vmul.f32 %v67, %v83
    %v196 = vmul.f32 %v68, %v84
    %v197 = vmul.f32 %v69, %v85
    %v198 = vmul.f32 %v70, %v86
    %v199 = vmul.f32 %v71, %v87
    %v200 = vmul.f32 %v72, %v88
    %201 = vadd.xlane.f32.xlu0 %v185
    %v202 = vpop.xlane.xlu0 %201
    %203 = vadd.xlane.f32.xlu0 %v186
    %v204 = vpop.xlane.xlu0 %203
    %205 = vadd.xlane.f32.xlu0 %v187
    %v206 = vpop.xlane.xlu0 %205
    %207 = vadd.xlane.f32.xlu0 %v188
    %v208 = vpop.xlane.xlu0 %207
    %209 = vadd.xlane.f32.xlu0 %v189
    %v210 = vpop.xlane.xlu0 %209
    %211 = vadd.xlane.f32.xlu0 %v190
    %v212 = vpop.xlane.xlu0 %211
    %213 = vadd.xlane.f32.xlu0 %v191
    %v214 = vpop.xlane.xlu0 %213
    %215 = vadd.xlane.f32.xlu0 %v192
    %v216 = vpop.xlane.xlu0 %215
    %217 = vadd.xlane.f32.xlu0 %v193
    %v218 = vpop.xlane.xlu0 %217
    %219 = vadd.xlane.f32.xlu0 %v194
    %v220 = vpop.xlane.xlu0 %219
    %221 = vadd.xlane.f32.xlu0 %v195
    %v222 = vpop.xlane.xlu0 %221
    %223 = vadd.xlane.f32.xlu0 %v196
    %v224 = vpop.xlane.xlu0 %223
    %225 = vadd.xlane.f32.xlu0 %v197
    %v226 = vpop.xlane.xlu0 %225
    %227 = vadd.xlane.f32.xlu0 %v198
    %v228 = vpop.xlane.xlu0 %227
    %229 = vadd.xlane.f32.xlu0 %v199
    %v230 = vpop.xlane.xlu0 %229
    %231 = vadd.xlane.f32.xlu0 %v200
    %v232 = vpop.xlane.xlu0 %231
    %v233 = vmul.f32 %v202, 14.285714
    %v234 = vmul.f32 %v204, 14.285714
    %v235 = vmul.f32 %v206, 14.285714
    %v236 = vmul.f32 %v208, 14.285714
    %v237 = vmul.f32 %v210, 14.285714
    %v238 = vmul.f32 %v212, 14.285714
    %v239 = vmul.f32 %v214, 14.285714
    %v240 = vmul.f32 %v216, 14.285714
    %v241 = vmul.f32 %v218, 14.285714
    %v242 = vmul.f32 %v220, 14.285714
    %v243 = vmul.f32 %v222, 14.285714
    %v244 = vmul.f32 %v224, 14.285714
    %v245 = vmul.f32 %v226, 14.285714
    %v246 = vmul.f32 %v228, 14.285714
    %v247 = vmul.f32 %v230, 14.285714
    %v248 = vmul.f32 %v232, 14.285714
    %v249 = vmul.f32 %v106, %v154
    %v250 = vmul.f32 %v108, %v156
    %v251 = vmul.f32 %v110, %v158
    %v252 = vmul.f32 %v112, %v160
    %v253 = vmul.f32 %v114, %v162
    %v254 = vmul.f32 %v116, %v164
    %v255 = vmul.f32 %v118, %v166
    %v256 = vmul.f32 %v120, %v168
    %v257 = vmul.f32 %v122, %v170
    %v258 = vmul.f32 %v124, %v172
    %v259 = vmul.f32 %v126, %v174
    %v260 = vmul.f32 %v128, %v176
    %v261 = vmul.f32 %v130, %v178
    %v262 = vmul.f32 %v132, %v180
    %v263 = vmul.f32 %v134, %v182
    %v264 = vmul.f32 %v136, %v184
    %v265 = vmax.f32 %v249, 1e-16
    %v266 = vmax.f32 %v250, 1e-16
    %v267 = vmax.f32 %v251, 1e-16
    %v268 = vmax.f32 %v252, 1e-16
    %v269 = vmax.f32 %v253, 1e-16
    %v270 = vmax.f32 %v254, 1e-16
    %v271 = vmax.f32 %v255, 1e-16
    %v272 = vmax.f32 %v256, 1e-16
    %v273 = vmax.f32 %v257, 1e-16
    %v274 = vmax.f32 %v258, 1e-16
    %v275 = vmax.f32 %v259, 1e-16
    %v276 = vmax.f32 %v260, 1e-16
    %v277 = vmax.f32 %v261, 1e-16
    %v278 = vmax.f32 %v262, 1e-16
    %v279 = vmax.f32 %v263, 1e-16
    %v280 = vmax.f32 %v264, 1e-16
    %v281 = vrsqrt.pop %v265
    %v282 = vrsqrt.pop %v266
    %v283 = vrsqrt.pop %v267
    %v284 = vrsqrt.pop %v268
    %v285 = vrsqrt.pop %v269
    %v286 = vrsqrt.pop %v270
    %v287 = vrsqrt.pop %v271
    %v288 = vrsqrt.pop %v272
    %v289 = vrsqrt.pop %v273
    %v290 = vrsqrt.pop %v274
    %v291 = vrsqrt.pop %v275
    %v292 = vrsqrt.pop %v276
    %v293 = vrsqrt.pop %v277
    %v294 = vrsqrt.pop %v278
    %v295 = vrsqrt.pop %v279
    %v296 = vrsqrt.pop %v280
    %v297 = vmul.f32 %v233, %v281
    %v298 = vmul.f32 %v234, %v282
    %v299 = vmul.f32 %v235, %v283
    %v300 = vmul.f32 %v236, %v284
    %v301 = vmul.f32 %v237, %v285
    %v302 = vmul.f32 %v238, %v286
    %v303 = vmul.f32 %v239, %v287
    %v304 = vmul.f32 %v240, %v288
    %v305 = vmul.f32 %v241, %v289
    %v306 = vmul.f32 %v242, %v290
    %v307 = vmul.f32 %v243, %v291
    %v308 = vmul.f32 %v244, %v292
    %v309 = vmul.f32 %v245, %v293
    %v310 = vmul.f32 %v246, %v294
    %v311 = vmul.f32 %v247, %v295
    %v312 = vmul.f32 %v248, %v296
    %v313 = vmax.f32 %v106, 1e-16
    %v314 = vmax.f32 %v108, 1e-16
    %v315 = vmax.f32 %v110, 1e-16
    %v316 = vmax.f32 %v112, 1e-16
    %v317 = vmax.f32 %v114, 1e-16
    %v318 = vmax.f32 %v116, 1e-16
    %v319 = vmax.f32 %v118, 1e-16
    %v320 = vmax.f32 %v120, 1e-16
    %v321 = vmax.f32 %v122, 1e-16
    %v322 = vmax.f32 %v124, 1e-16
    %v323 = vmax.f32 %v126, 1e-16
    %v324 = vmax.f32 %v128, 1e-16
    %v325 = vmax.f32 %v130, 1e-16
    %v326 = vmax.f32 %v132, 1e-16
    %v327 = vmax.f32 %v134, 1e-16
    %v328 = vmax.f32 %v136, 1e-16
    %v329 = vrsqrt.pop %v313
    %v330 = vrsqrt.pop %v314
    %v331 = vrsqrt.pop %v315
    %v332 = vrsqrt.pop %v316
    %v333 = vrsqrt.pop %v317
    %v334 = vrsqrt.pop %v318
    %v335 = vrsqrt.pop %v319
    %v336 = vrsqrt.pop %v320
    %v337 = vrsqrt.pop %v321
    %v338 = vrsqrt.pop %v322
    %v339 = vrsqrt.pop %v323
    %v340 = vrsqrt.pop %v324
    %v341 = vrsqrt.pop %v325
    %v342 = vrsqrt.pop %v326
    %v343 = vrsqrt.pop %v327
    %v344 = vrsqrt.pop %v328
    %v345 = vmul.f32 %v329, 14.285714
    %v346 = vmul.f32 %v330, 14.285714
    %v347 = vmul.f32 %v331, 14.285714
    %v348 = vmul.f32 %v332, 14.285714
    %v349 = vmul.f32 %v333, 14.285714
    %v350 = vmul.f32 %v334, 14.285714
    %v351 = vmul.f32 %v335, 14.285714
    %v352 = vmul.f32 %v336, 14.285714
    %v353 = vmul.f32 %v337, 14.285714
    %v354 = vmul.f32 %v338, 14.285714
    %v355 = vmul.f32 %v339, 14.285714
    %v356 = vmul.f32 %v340, 14.285714
    %v357 = vmul.f32 %v341, 14.285714
    %v358 = vmul.f32 %v342, 14.285714
    %v359 = vmul.f32 %v343, 14.285714
    %v360 = vmul.f32 %v344, 14.285714
    %v361 = vmul.f32 %v57, %v345
    %v362 = vmul.f32 %v58, %v346
    %v363 = vmul.f32 %v59, %v347
    %v364 = vmul.f32 %v60, %v348
    %v365 = vmul.f32 %v61, %v349
    %v366 = vmul.f32 %v62, %v350
    %v367 = vmul.f32 %v63, %v351
    %v368 = vmul.f32 %v64, %v352
    %v369 = vmul.f32 %v65, %v353
    %v370 = vmul.f32 %v66, %v354
    %v371 = vmul.f32 %v67, %v355
    %v372 = vmul.f32 %v68, %v356
    %v373 = vmul.f32 %v69, %v357
    %v374 = vmul.f32 %v70, %v358
    %v375 = vmul.f32 %v71, %v359
    %v376 = vmul.f32 %v72, %v360
    %v377 = vpack.c.bf16 %v362, %v361
    %v378 = vpack.c.bf16 %v364, %v363
    %v379 = vpack.c.bf16 %v366, %v365
    %v380 = vpack.c.bf16 %v368, %v367
    %v381 = vpack.c.bf16 %v370, %v369
    %v382 = vpack.c.bf16 %v372, %v371
    %v383 = vpack.c.bf16 %v374, %v373
    %v384 = vpack.c.bf16 %v376, %v375
    %v385 = vld [vmem:[#allocation6] sm:$0xf]
    %v386 = vld [vmem:[#allocation6 + $0x4] sm:$0xf]
    %v387 = vld [vmem:[#allocation6 + $0x8] sm:$0xf]
    %v388 = vld [vmem:[#allocation6 + $0xc] sm:$0xf]
    %v389 = vld [vmem:[#allocation6 + $0x10] sm:$0xf]
    %v390 = vld [vmem:[#allocation6 + $0x14] sm:$0xf]
    %v391 = vld [vmem:[#allocation6 + $0x18] sm:$0xf]
    %v392 = vld [vmem:[#allocation6 + $0x1c] sm:$0xf]
    %v393 = vld [vmem:[#allocation6 + $0x20] sm:$0xf]
    %v394 = vld [vmem:[#allocation6 + $0x24] sm:$0xf]
    %v395 = vld [vmem:[#allocation6 + $0x28] sm:$0xf]
    %v396 = vld [vmem:[#allocation6 + $0x2c] sm:$0xf]
    %v397 = vld [vmem:[#allocation6 + $0x30] sm:$0xf]
    %v398 = vld [vmem:[#allocation6 + $0x34] sm:$0xf]
    %v399 = vld [vmem:[#allocation6 + $0x38] sm:$0xf]
    %v400 = vld [vmem:[#allocation6 + $0x3c] sm:$0xf]
    %v417 = vunpack.c.l.b16 %v385
    %v418 = vunpack.c.l.b16 %v386
    %v419 = vunpack.c.l.b16 %v387
    %v420 = vunpack.c.l.b16 %v388
    %v421 = vunpack.c.l.b16 %v389
    %v422 = vunpack.c.l.b16 %v390
    %v423 = vunpack.c.l.b16 %v391
    %v424 = vunpack.c.l.b16 %v392
    %v425 = vunpack.c.l.b16 %v393
    %v426 = vunpack.c.l.b16 %v394
    %v427 = vunpack.c.l.b16 %v395
    %v428 = vunpack.c.l.b16 %v396
    %v429 = vunpack.c.l.b16 %v397
    %v430 = vunpack.c.l.b16 %v398
    %v431 = vunpack.c.l.b16 %v399
    %v432 = vunpack.c.l.b16 %v400
    %v433 = vpack.c.b16 %v418, %v417
    %v434 = vpack.c.b16 %v420, %v419
    %v435 = vpack.c.b16 %v422, %v421
    %v436 = vpack.c.b16 %v424, %v423
    %v437 = vpack.c.b16 %v426, %v425
    %v438 = vpack.c.b16 %v428, %v427
    %v439 = vpack.c.b16 %v430, %v429
    %v440 = vpack.c.b16 %v432, %v431
    %449 = vmatprep.subr.bf16.mxu0 0
    %450 = vmatpush1.bf16.msra.mxu0 %v440
    %451 = vmatprep.subr.bf16.mxu0 0
    %452 = vmatpush1.bf16.msra.mxu0 %v439
    %453 = vmatprep.subr.bf16.mxu0 0
    %454 = vmatpush1.bf16.msra.mxu0 %v438
    %455 = vmatprep.subr.bf16.mxu0 0
    %456 = vmatpush1.bf16.msra.mxu0 %v437
    %457 = vmatprep.subr.bf16.mxu0 0
    %458 = vmatpush1.bf16.msra.mxu0 %v436
    %459 = vmatprep.subr.bf16.mxu0 0
    %460 = vmatpush1.bf16.msra.mxu0 %v435
    %461 = vmatprep.subr.bf16.mxu0 0
    %462 = vmatpush1.bf16.msra.mxu0 %v434
    %463 = vmatprep.subr.bf16.mxu0 0
    %464 = vmatpush1.bf16.msra.mxu0 %v433
    %465 = vmatprep.subr.bf16.mxu0 0
    %466 = vmatpush2.bf16.msra.mxu0 0
    %467 = vmatprep.subr.bf16.mxu0 0
    %468 = vmatpush2.bf16.msra.mxu0 0
    %469 = vmatprep.subr.bf16.mxu0 0
    %470 = vmatpush2.bf16.msra.mxu0 0
    %471 = vmatprep.subr.bf16.mxu0 0
    %472 = vmatpush2.bf16.msra.mxu0 0
    %473 = vmatprep.subr.bf16.mxu0 0
    %474 = vmatpush2.bf16.msra.mxu0 0
    %475 = vmatprep.subr.bf16.mxu0 0
    %476 = vmatpush2.bf16.msra.mxu0 0
    %477 = vmatprep.subr.bf16.mxu0 0
    %478 = vmatpush2.bf16.msra.mxu0 0
    %479 = vmatprep.subr.bf16.mxu0 0
    %480 = vmatpush2.bf16.msra.mxu0 0
    %481 = vmatprep.mubr.bf16.mxu0 0
    %482 = vmatmul.mubr.bf16.gmra.mxu0 %v377
    %v483 = vpop.f32.mrf.mxu0
    %v484 = vadd.f32 0.0, %v483
    %v485 = vpop.f32.mrf.mxu0
    %v486 = vpop.f32.mrf.mxu0
    %v487 = vadd.f32 0.0, %v486
    %v488 = vpop.f32.mrf.mxu0
    %489 = vmatprep.mubr.bf16.mxu0 0
    %490 = vmatmul.mubr.bf16.gmra.mxu0 %v378
    %v491 = vpop.f32.mrf.mxu0
    %v492 = vadd.f32 0.0, %v491
    %v493 = vpop.f32.mrf.mxu0
    %v494 = vpop.f32.mrf.mxu0
    %v495 = vadd.f32 0.0, %v494
    %v496 = vpop.f32.mrf.mxu0
    %497 = vmatprep.mubr.bf16.mxu0 0
    %498 = vmatmul.mubr.bf16.gmra.mxu0 %v379
    %v499 = vpop.f32.mrf.mxu0
    %v500 = vadd.f32 0.0, %v499
    %v501 = vpop.f32.mrf.mxu0
    %v502 = vpop.f32.mrf.mxu0
    %v503 = vadd.f32 0.0, %v502
    %v504 = vpop.f32.mrf.mxu0
    %505 = vmatprep.mubr.bf16.mxu0 0
    %506 = vmatmul.mubr.bf16.gmra.mxu0 %v380
    %v507 = vpop.f32.mrf.mxu0
    %v508 = vadd.f32 0.0, %v507
    %v509 = vpop.f32.mrf.mxu0
    %v510 = vpop.f32.mrf.mxu0
    %v511 = vadd.f32 0.0, %v510
    %v512 = vpop.f32.mrf.mxu0
    %513 = vmatprep.mubr.bf16.mxu0 0
    %514 = vmatmul.mubr.bf16.gmra.mxu0 %v381
    %v515 = vpop.f32.mrf.mxu0
    %v516 = vadd.f32 0.0, %v515
    %v517 = vpop.f32.mrf.mxu0
    %v518 = vpop.f32.mrf.mxu0
    %v519 = vadd.f32 0.0, %v518
    %v520 = vpop.f32.mrf.mxu0
    %521 = vmatprep.mubr.bf16.mxu0 0
    %522 = vmatmul.mubr.bf16.gmra.mxu0 %v382
    %v523 = vpop.f32.mrf.mxu0
    %v524 = vadd.f32 0.0, %v523
    %v525 = vpop.f32.mrf.mxu0
    %v526 = vpop.f32.mrf.mxu0
    %v527 = vadd.f32 0.0, %v526
    %v528 = vpop.f32.mrf.mxu0
    %529 = vmatprep.mubr.bf16.mxu0 0
    %530 = vmatmul.mubr.bf16.gmra.mxu0 %v383
    %v531 = vpop.f32.mrf.mxu0
    %v532 = vadd.f32 0.0, %v531
    %v533 = vpop.f32.mrf.mxu0
    %v534 = vpop.f32.mrf.mxu0
    %v535 = vadd.f32 0.0, %v534
    %v536 = vpop.f32.mrf.mxu0
    %537 = vmatprep.mubr.bf16.mxu0 0
    %538 = vmatmul.mubr.bf16.gmra.mxu0 %v384
    %v539 = vpop.f32.mrf.mxu0
    %v540 = vadd.f32 0.0, %v539
    %v541 = vpop.f32.mrf.mxu0
    %v542 = vpop.f32.mrf.mxu0
    %v543 = vadd.f32 0.0, %v542
    %v544 = vpop.f32.mrf.mxu0
    %545 = vdwg.mxu0
    %v546 = vlaneseq
    %v547 = vand.u32 %v546, 127
    %v548 = vlaneseq
    %v549 = vshrl.u32 %v548, 7
    %v550 = vadd.s32 %v549, 8
    %v551 = vadd.s32 %v549, 16
    %v552 = vadd.s32 %v549, 24
    %v553 = vadd.s32 %v549, 32
    %v554 = vadd.s32 %v549, 40
    %v555 = vadd.s32 %v549, 48
    %v556 = vadd.s32 %v549, 56
    %v557 = vadd.s32 %v549, 64
    %v558 = vadd.s32 %v549, 72
    %v559 = vadd.s32 %v549, 80
    %v560 = vadd.s32 %v549, 88
    %v561 = vadd.s32 %v549, 96
    %v562 = vadd.s32 %v549, 104
    %v563 = vadd.s32 %v549, 112
    %v564 = vadd.s32 %v549, 120
    %v565 = vstv %s56
    %v566 = vadd.s32 %v565, %v549
    %v567 = vadd.s32 %v565, %v550
    %v568 = vadd.s32 %v565, %v551
    %v569 = vadd.s32 %v565, %v552
    %v570 = vadd.s32 %v565, %v553
    %v571 = vadd.s32 %v565, %v554
    %v572 = vadd.s32 %v565, %v555
    %v573 = vadd.s32 %v565, %v556
    %v574 = vadd.s32 %v565, %v557
    %v575 = vadd.s32 %v565, %v558
    %v576 = vadd.s32 %v565, %v559
    %v577 = vadd.s32 %v565, %v560
    %v578 = vadd.s32 %v565, %v561
    %v579 = vadd.s32 %v565, %v562
    %v580 = vadd.s32 %v565, %v563
    %v581 = vadd.s32 %v565, %v564
    %vm582 = vcmp.eq.s32.totalorder %v547, %v566
    %vm583 = vcmp.eq.s32.totalorder %v547, %v567
    %vm584 = vcmp.eq.s32.totalorder %v547, %v568
    %vm585 = vcmp.eq.s32.totalorder %v547, %v569
    %vm586 = vcmp.eq.s32.totalorder %v547, %v570
    %vm587 = vcmp.eq.s32.totalorder %v547, %v571
    %vm588 = vcmp.eq.s32.totalorder %v547, %v572
    %vm589 = vcmp.eq.s32.totalorder %v547, %v573
    %vm590 = vcmp.eq.s32.totalorder %v547, %v574
    %vm591 = vcmp.eq.s32.totalorder %v547, %v575
    %vm592 = vcmp.eq.s32.totalorder %v547, %v576
    %vm593 = vcmp.eq.s32.totalorder %v547, %v577
    %vm594 = vcmp.eq.s32.totalorder %v547, %v578
    %vm595 = vcmp.eq.s32.totalorder %v547, %v579
    %vm596 = vcmp.eq.s32.totalorder %v547, %v580
    %vm597 = vcmp.eq.s32.totalorder %v547, %v581
    %v598 = vsel %vm582, -142.85715, %v484
    %v599 = vsel %vm583, -142.85715, %v487
    %v600 = vsel %vm584, -142.85715, %v492
    %v601 = vsel %vm585, -142.85715, %v495
    %v602 = vsel %vm586, -142.85715, %v500
    %v603 = vsel %vm587, -142.85715, %v503
    %v604 = vsel %vm588, -142.85715, %v508
    %v605 = vsel %vm589, -142.85715, %v511
    %v606 = vsel %vm590, -142.85715, %v516
    %v607 = vsel %vm591, -142.85715, %v519
    %v608 = vsel %vm592, -142.85715, %v524
    %v609 = vsel %vm593, -142.85715, %v527
    %v610 = vsel %vm594, -142.85715, %v532
    %v611 = vsel %vm595, -142.85715, %v535
    %v612 = vsel %vm596, -142.85715, %v540
    %v613 = vsel %vm597, -142.85715, %v543
    %614 = vmax.xlane.f32.xlu0 %v598
    %v615 = vpop.xlane.xlu0 %614
    %616 = vmax.xlane.f32.xlu0 %v599
    %v617 = vpop.xlane.xlu0 %616
    %618 = vmax.xlane.f32.xlu0 %v600
    %v619 = vpop.xlane.xlu0 %618
    %620 = vmax.xlane.f32.xlu0 %v601
    %v621 = vpop.xlane.xlu0 %620
    %622 = vmax.xlane.f32.xlu0 %v602
    %v623 = vpop.xlane.xlu0 %622
    %624 = vmax.xlane.f32.xlu0 %v603
    %v625 = vpop.xlane.xlu0 %624
    %626 = vmax.xlane.f32.xlu0 %v604
    %v627 = vpop.xlane.xlu0 %626
    %628 = vmax.xlane.f32.xlu0 %v605
    %v629 = vpop.xlane.xlu0 %628
    %630 = vmax.xlane.f32.xlu0 %v606
    %v631 = vpop.xlane.xlu0 %630
    %632 = vmax.xlane.f32.xlu0 %v607
    %v633 = vpop.xlane.xlu0 %632
    %634 = vmax.xlane.f32.xlu0 %v608
    %v635 = vpop.xlane.xlu0 %634
    %636 = vmax.xlane.f32.xlu0 %v609
    %v637 = vpop.xlane.xlu0 %636
    %638 = vmax.xlane.f32.xlu0 %v610
    %v639 = vpop.xlane.xlu0 %638
    %640 = vmax.xlane.f32.xlu0 %v611
    %v641 = vpop.xlane.xlu0 %640
    %642 = vmax.xlane.f32.xlu0 %v612
    %v643 = vpop.xlane.xlu0 %642
    %644 = vmax.xlane.f32.xlu0 %v613
    %v645 = vpop.xlane.xlu0 %644
    %v646 = vmax.f32 %v615, %v297
    %v647 = vmax.f32 %v617, %v298
    %v648 = vmax.f32 %v619, %v299
    %v649 = vmax.f32 %v621, %v300
    %v650 = vmax.f32 %v623, %v301
    %v651 = vmax.f32 %v625, %v302
    %v652 = vmax.f32 %v627, %v303
    %v653 = vmax.f32 %v629, %v304
    %v654 = vmax.f32 %v631, %v305
    %v655 = vmax.f32 %v633, %v306
    %v656 = vmax.f32 %v635, %v307
    %v657 = vmax.f32 %v637, %v308
    %v658 = vmax.f32 %v639, %v309
    %v659 = vmax.f32 %v641, %v310
    %v660 = vmax.f32 %v643, %v311
    %v661 = vmax.f32 %v645, %v312
    %v662 = vsub.f32 %v598, %v646
    %v663 = vsub.f32 %v599, %v647
    %v664 = vsub.f32 %v600, %v648
    %v665 = vsub.f32 %v601, %v649
    %v666 = vsub.f32 %v602, %v650
    %v667 = vsub.f32 %v603, %v651
    %v668 = vsub.f32 %v604, %v652
    %v669 = vsub.f32 %v605, %v653
    %v670 = vsub.f32 %v606, %v654
    %v671 = vsub.f32 %v607, %v655
    %v672 = vsub.f32 %v608, %v656
    %v673 = vsub.f32 %v609, %v657
    %v674 = vsub.f32 %v610, %v658
    %v675 = vsub.f32 %v611, %v659
    %v676 = vsub.f32 %v612, %v660
    %v677 = vsub.f32 %v613, %v661
    %v678 = vmul.f32 %v662, 1.442695
    %v679 = vpow.pop %v678
    %v680 = vmul.f32 %v663, 1.442695
    %v681 = vpow.pop %v680
    %v682 = vmul.f32 %v664, 1.442695
    %v683 = vpow.pop %v682
    %v684 = vmul.f32 %v665, 1.442695
    %v685 = vpow.pop %v684
    %v686 = vmul.f32 %v666, 1.442695
    %v687 = vpow.pop %v686
    %v688 = vmul.f32 %v667, 1.442695
    %v689 = vpow.pop %v688
    %v690 = vmul.f32 %v668, 1.442695
    %v691 = vpow.pop %v690
    %v692 = vmul.f32 %v669, 1.442695
    %v693 = vpow.pop %v692
    %v694 = vmul.f32 %v670, 1.442695
    %v695 = vpow.pop %v694
    %v696 = vmul.f32 %v671, 1.442695
    %v697 = vpow.pop %v696
    %v698 = vmul.f32 %v672, 1.442695
    %v699 = vpow.pop %v698
    %v700 = vmul.f32 %v673, 1.442695
    %v701 = vpow.pop %v700
    %v702 = vmul.f32 %v674, 1.442695
    %v703 = vpow.pop %v702
    %v704 = vmul.f32 %v675, 1.442695
    %v705 = vpow.pop %v704
    %v706 = vmul.f32 %v676, 1.442695
    %v707 = vpow.pop %v706
    %v708 = vmul.f32 %v677, 1.442695
    %v709 = vpow.pop %v708
    %710 = vadd.xlane.f32.xlu0 %v679
    %v711 = vpop.xlane.xlu0 %710
    %712 = vadd.xlane.f32.xlu0 %v681
    %v713 = vpop.xlane.xlu0 %712
    %714 = vadd.xlane.f32.xlu0 %v683
    %v715 = vpop.xlane.xlu0 %714
    %716 = vadd.xlane.f32.xlu0 %v685
    %v717 = vpop.xlane.xlu0 %716
    %718 = vadd.xlane.f32.xlu0 %v687
    %v719 = vpop.xlane.xlu0 %718
    %720 = vadd.xlane.f32.xlu0 %v689
    %v721 = vpop.xlane.xlu0 %720
    %722 = vadd.xlane.f32.xlu0 %v691
    %v723 = vpop.xlane.xlu0 %722
    %724 = vadd.xlane.f32.xlu0 %v693
    %v725 = vpop.xlane.xlu0 %724
    %726 = vadd.xlane.f32.xlu0 %v695
    %v727 = vpop.xlane.xlu0 %726
    %728 = vadd.xlane.f32.xlu0 %v697
    %v729 = vpop.xlane.xlu0 %728
    %730 = vadd.xlane.f32.xlu0 %v699
    %v731 = vpop.xlane.xlu0 %730
    %732 = vadd.xlane.f32.xlu0 %v701
    %v733 = vpop.xlane.xlu0 %732
    %734 = vadd.xlane.f32.xlu0 %v703
    %v735 = vpop.xlane.xlu0 %734
    %736 = vadd.xlane.f32.xlu0 %v705
    %v737 = vpop.xlane.xlu0 %736
    %738 = vadd.xlane.f32.xlu0 %v707
    %v739 = vpop.xlane.xlu0 %738
    %740 = vadd.xlane.f32.xlu0 %v709
    %v741 = vpop.xlane.xlu0 %740
    %v742 = vsub.f32 %v297, %v646
    %v743 = vsub.f32 %v298, %v647
    %v744 = vsub.f32 %v299, %v648
    %v745 = vsub.f32 %v300, %v649
    %v746 = vsub.f32 %v301, %v650
    %v747 = vsub.f32 %v302, %v651
    %v748 = vsub.f32 %v303, %v652
    %v749 = vsub.f32 %v304, %v653
    %v750 = vsub.f32 %v305, %v654
    %v751 = vsub.f32 %v306, %v655
    %v752 = vsub.f32 %v307, %v656
    %v753 = vsub.f32 %v308, %v657
    %v754 = vsub.f32 %v309, %v658
    %v755 = vsub.f32 %v310, %v659
    %v756 = vsub.f32 %v311, %v660
    %v757 = vsub.f32 %v312, %v661
    %v758 = vmul.f32 %v742, 1.442695
    %v759 = vpow.pop %v758
    %v760 = vmul.f32 %v743, 1.442695
    %v761 = vpow.pop %v760
    %v762 = vmul.f32 %v744, 1.442695
    %v763 = vpow.pop %v762
    %v764 = vmul.f32 %v745, 1.442695
    %v765 = vpow.pop %v764
    %v766 = vmul.f32 %v746, 1.442695
    %v767 = vpow.pop %v766
    %v768 = vmul.f32 %v747, 1.442695
    %v769 = vpow.pop %v768
    %v770 = vmul.f32 %v748, 1.442695
    %v771 = vpow.pop %v770
    %v772 = vmul.f32 %v749, 1.442695
    %v773 = vpow.pop %v772
    %v774 = vmul.f32 %v750, 1.442695
    %v775 = vpow.pop %v774
    %v776 = vmul.f32 %v751, 1.442695
    %v777 = vpow.pop %v776
    %v778 = vmul.f32 %v752, 1.442695
    %v779 = vpow.pop %v778
    %v780 = vmul.f32 %v753, 1.442695
    %v781 = vpow.pop %v780
    %v782 = vmul.f32 %v754, 1.442695
    %v783 = vpow.pop %v782
    %v784 = vmul.f32 %v755, 1.442695
    %v785 = vpow.pop %v784
    %v786 = vmul.f32 %v756, 1.442695
    %v787 = vpow.pop %v786
    %v788 = vmul.f32 %v757, 1.442695
    %v789 = vpow.pop %v788
    %v790 = vadd.f32 %v711, %v759
    %v791 = vadd.f32 %v713, %v761
    %v792 = vadd.f32 %v715, %v763
    %v793 = vadd.f32 %v717, %v765
    %v794 = vadd.f32 %v719, %v767
    %v795 = vadd.f32 %v721, %v769
    %v796 = vadd.f32 %v723, %v771
    %v797 = vadd.f32 %v725, %v773
    %v798 = vadd.f32 %v727, %v775
    %v799 = vadd.f32 %v729, %v777
    %v800 = vadd.f32 %v731, %v779
    %v801 = vadd.f32 %v733, %v781
    %v802 = vadd.f32 %v735, %v783
    %v803 = vadd.f32 %v737, %v785
    %v804 = vadd.f32 %v739, %v787
    %v805 = vadd.f32 %v741, %v789
    %v806 = vsub.f32 0.0, %v646
    %v807 = vsub.f32 0.0, %v647
    %v808 = vsub.f32 0.0, %v648
    %v809 = vsub.f32 0.0, %v649
    %v810 = vsub.f32 0.0, %v650
    %v811 = vsub.f32 0.0, %v651
    %v812 = vsub.f32 0.0, %v652
    %v813 = vsub.f32 0.0, %v653
    %v814 = vsub.f32 0.0, %v654
    %v815 = vsub.f32 0.0, %v655
    %v816 = vsub.f32 0.0, %v656
    %v817 = vsub.f32 0.0, %v657
    %v818 = vsub.f32 0.0, %v658
    %v819 = vsub.f32 0.0, %v659
    %v820 = vsub.f32 0.0, %v660
    %v821 = vsub.f32 0.0, %v661
    %v822 = vmul.f32 %v806, 1.442695
    %v823 = vpow.pop %v822
    %v824 = vmul.f32 %v807, 1.442695
    %v825 = vpow.pop %v824
    %v826 = vmul.f32 %v808, 1.442695
    %v827 = vpow.pop %v826
    %v828 = vmul.f32 %v809, 1.442695
    %v829 = vpow.pop %v828
    %v830 = vmul.f32 %v810, 1.442695
    %v831 = vpow.pop %v830
    %v832 = vmul.f32 %v811, 1.442695
    %v833 = vpow.pop %v832
    %v834 = vmul.f32 %v812, 1.442695
    %v835 = vpow.pop %v834
    %v836 = vmul.f32 %v813, 1.442695
    %v837 = vpow.pop %v836
    %v838 = vmul.f32 %v814, 1.442695
    %v839 = vpow.pop %v838
    %v840 = vmul.f32 %v815, 1.442695
    %v841 = vpow.pop %v840
    %v842 = vmul.f32 %v816, 1.442695
    %v843 = vpow.pop %v842
    %v844 = vmul.f32 %v817, 1.442695
    %v845 = vpow.pop %v844
    %v846 = vmul.f32 %v818, 1.442695
    %v847 = vpow.pop %v846
    %v848 = vmul.f32 %v819, 1.442695
    %v849 = vpow.pop %v848
    %v850 = vmul.f32 %v820, 1.442695
    %v851 = vpow.pop %v850
    %v852 = vmul.f32 %v821, 1.442695
    %v853 = vpow.pop %v852
    %v854 = vmul.f32 %v823, 120.0
    %v855 = vmul.f32 %v825, 120.0
    %v856 = vmul.f32 %v827, 120.0
    %v857 = vmul.f32 %v829, 120.0
    %v858 = vmul.f32 %v831, 120.0
    %v859 = vmul.f32 %v833, 120.0
    %v860 = vmul.f32 %v835, 120.0
    %v861 = vmul.f32 %v837, 120.0
    %v862 = vmul.f32 %v839, 120.0
    %v863 = vmul.f32 %v841, 120.0
    %v864 = vmul.f32 %v843, 120.0
    %v865 = vmul.f32 %v845, 120.0
    %v866 = vmul.f32 %v847, 120.0
    %v867 = vmul.f32 %v849, 120.0
    %v868 = vmul.f32 %v851, 120.0
    %v869 = vmul.f32 %v853, 120.0
    %v870 = vsub.f32 %v790, %v854
    %v871 = vsub.f32 %v791, %v855
    %v872 = vsub.f32 %v792, %v856
    %v873 = vsub.f32 %v793, %v857
    %v874 = vsub.f32 %v794, %v858
    %v875 = vsub.f32 %v795, %v859
    %v876 = vsub.f32 %v796, %v860
    %v877 = vsub.f32 %v797, %v861
    %v878 = vsub.f32 %v798, %v862
    %v879 = vsub.f32 %v799, %v863
    %v880 = vsub.f32 %v800, %v864
    %v881 = vsub.f32 %v801, %v865
    %v882 = vsub.f32 %v802, %v866
    %v883 = vsub.f32 %v803, %v867
    %v884 = vsub.f32 %v804, %v868
    %v885 = vsub.f32 %v805, %v869
    %v886 = vlog2.pop %v870
    %v887 = vmul.f32 %v886, 0.6931472
    %v888 = vlog2.pop %v871
    %v889 = vmul.f32 %v888, 0.6931472
    %v890 = vlog2.pop %v872
    %v891 = vmul.f32 %v890, 0.6931472
    %v892 = vlog2.pop %v873
    %v893 = vmul.f32 %v892, 0.6931472
    %v894 = vlog2.pop %v874
    %v895 = vmul.f32 %v894, 0.6931472
    %v896 = vlog2.pop %v875
    %v897 = vmul.f32 %v896, 0.6931472
    %v898 = vlog2.pop %v876
    %v899 = vmul.f32 %v898, 0.6931472
    %v900 = vlog2.pop %v877
    %v901 = vmul.f32 %v900, 0.6931472
    %v902 = vlog2.pop %v878
    %v903 = vmul.f32 %v902, 0.6931472
    %v904 = vlog2.pop %v879
    %v905 = vmul.f32 %v904, 0.6931472
    %v906 = vlog2.pop %v880
    %v907 = vmul.f32 %v906, 0.6931472
    %v908 = vlog2.pop %v881
    %v909 = vmul.f32 %v908, 0.6931472
    %v910 = vlog2.pop %v882
    %v911 = vmul.f32 %v910, 0.6931472
    %v912 = vlog2.pop %v883
    %v913 = vmul.f32 %v912, 0.6931472
    %v914 = vlog2.pop %v884
    %v915 = vmul.f32 %v914, 0.6931472
    %v916 = vlog2.pop %v885
    %v917 = vmul.f32 %v916, 0.6931472
    %v918 = vadd.f32 %v646, %v887
    %v919 = vadd.f32 %v647, %v889
    %v920 = vadd.f32 %v648, %v891
    %v921 = vadd.f32 %v649, %v893
    %v922 = vadd.f32 %v650, %v895
    %v923 = vadd.f32 %v651, %v897
    %v924 = vadd.f32 %v652, %v899
    %v925 = vadd.f32 %v653, %v901
    %v926 = vadd.f32 %v654, %v903
    %v927 = vadd.f32 %v655, %v905
    %v928 = vadd.f32 %v656, %v907
    %v929 = vadd.f32 %v657, %v909
    %v930 = vadd.f32 %v658, %v911
    %v931 = vadd.f32 %v659, %v913
    %v932 = vadd.f32 %v660, %v915
    %v933 = vadd.f32 %v661, %v917
    %v934 = vsub.f32 %v918, %v297
    %v935 = vsub.f32 %v919, %v298
    %v936 = vsub.f32 %v920, %v299
    %v937 = vsub.f32 %v921, %v300
    %v938 = vsub.f32 %v922, %v301
    %v939 = vsub.f32 %v923, %v302
    %v940 = vsub.f32 %v924, %v303
    %v941 = vsub.f32 %v925, %v304
    %v942 = vsub.f32 %v926, %v305
    %v943 = vsub.f32 %v927, %v306
    %v944 = vsub.f32 %v928, %v307
    %v945 = vsub.f32 %v929, %v308
    %v946 = vsub.f32 %v930, %v309
    %v947 = vsub.f32 %v931, %v310
    %v948 = vsub.f32 %v932, %v311
    %v949 = vsub.f32 %v933, %v312
    %vm950 = vcmask 7168
    %951 = vst.msk [vmem:[%s3] sm:$0xff] %vm950, %v934
    %952 = vst.msk [vmem:[%s3 + $0x8] sm:$0xff] %vm950, %v935
    %953 = vst.msk [vmem:[%s3 + $0x10] sm:$0xff] %vm950, %v936
    %954 = vst.msk [vmem:[%s3 + $0x18] sm:$0xff] %vm950, %v937
    %955 = vst.msk [vmem:[%s3 + $0x20] sm:$0xff] %vm950, %v938
    %956 = vst.msk [vmem:[%s3 + $0x28] sm:$0xff] %vm950, %v939
    %957 = vst.msk [vmem:[%s3 + $0x30] sm:$0xff] %vm950, %v940
    %958 = vst.msk [vmem:[%s3 + $0x38] sm:$0xff] %vm950, %v941
    %959 = vst.msk [vmem:[%s3 + $0x40] sm:$0xff] %vm950, %v942
    %960 = vst.msk [vmem:[%s3 + $0x48] sm:$0xff] %vm950, %v943
    %961 = vst.msk [vmem:[%s3 + $0x50] sm:$0xff] %vm950, %v944
    %962 = vst.msk [vmem:[%s3 + $0x58] sm:$0xff] %vm950, %v945
    %963 = vst.msk [vmem:[%s3 + $0x60] sm:$0xff] %vm950, %v946
    %964 = vst.msk [vmem:[%s3 + $0x68] sm:$0xff] %vm950, %v947
    %965 = vst.msk [vmem:[%s3 + $0x70] sm:$0xff] %vm950, %v948
    %966 = vst.msk [vmem:[%s3 + $0x78] sm:$0xff] %vm950, %v949
    // Predicated region
    $region26: #{tpu_custom_call.1} parent=1 // pred_check
      _
    $region27: #{tpu_custom_call.1} parent=1 // pred_check_branch
      %968 = sbr.rel (0) target = $region29
    $region28: #{tpu_custom_call.1} parent=1 // pred_region
      _
    $region29: #{tpu_custom_call.1} parent=1 // pred_fallthru
      _
    // Predicated region
    $region30: #{tpu_custom_call.1} parent=1 // pred_check
      _
    $region31: #{tpu_custom_call.1} parent=1 // pred_check_branch
      %970 = sbr.rel (0) target = $region33
    $region32: #{tpu_custom_call.1} parent=1 // pred_region
      _
    $region33: #{tpu_custom_call.1} parent=1 // pred_fallthru
      _
    %971 = vsyncpa [#allocation3], 1
    %972 = vsyncpa [#allocation5], 1

// kernel: tpu_custom_call.1
$region0: #{tpu_custom_call.1}
  #allocation0 [shape = 'u32[]', space=smem, size = 0x4, offset = 0x4, fixed_abs, tag = 'smem constant byte address 0x4 - core index']
  #allocation1 [shape = 'u32[144,128]{1,0:T(1,128)}', space=vmem, size = 0x12000, scoped, tag = 'internal scratch']
  %s0 = inlined_call_operand.hbm [shape: f32[128,128], index: 0, kind: input, shape index: {}]
  %s1 = inlined_call_operand.hbm [shape: f32[128,128], index: 1, kind: input, shape index: {}]
  %s2 = inlined_call_operand.hbm [shape: bf16[128,128], index: 2, kind: input, shape index: {}]
  %s3 = inlined_call_operand.vmem [shape: f32[128,1], index: 3, kind: output, shape index: {}]
  %s4 = sld [smem:[#allocation0]]
  $region34: #{tpu_custom_call.1} parent=0
    _
  %s6 = ssub.s32 1, %s4
  %s7 = scalar_select 0, %s6, %s4
  $region1: #{tpu_custom_call.1} parent=0
    #allocation2 [shape = 'u8[65536]{0}', space=vmem, size = 0x10000, scoped, tag = 'input window, operand 0, single buffered']
    #allocation3 [shape = 's32[1]{0}', space=sflag, size = 0x4, scoped, tag = 'scoped memory for tpu_custom_call.1']
    #allocation4 [shape = 'u8[65536]{0}', space=vmem, size = 0x10000, scoped, tag = 'input window, operand 1, single buffered']
    #allocation5 [shape = 's32[1]{0}', space=sflag, size = 0x4, scoped, tag = 'scoped memory for tpu_custom_call.1']
    #allocation6 [shape = 'u8[32768]{0}', space=vmem, size = 0x8000, scoped, tag = 'input window, operand 2, single buffered']
    %8 = vsyncpa [#allocation3], 0
    %9 = vsyncpa [#allocation5], 0
    // Predicated region
    $region2: #{tpu_custom_call.1} parent=1 // pred_check
      _
    $region3: #{tpu_custom_call.1} parent=1 // pred_check_branch
      %11 = sbr.rel (0) target = $region5
    $region4: #{tpu_custom_call.1} parent=1 // pred_region
      %s13 = ssub.s32 2048, 2048
      %14 = vsyncadd [#allocation3], %s13
      %s15 = sshll.u32 [#allocation2], 4
      %s16 = int_to_ptr.vmem [resolvable:$true] %s15
      %21 = dma.hbm_to_vmem [thread:$0]  %s0, 2048, %s16, [#allocation3], 128, 128, 8
    $region5: #{tpu_custom_call.1} parent=1 // pred_fallthru
      _
    // Predicated region
    $region6: #{tpu_custom_call.1} parent=1 // pred_check
      _
    $region7: #{tpu_custom_call.1} parent=1 // pred_check_branch
      %23 = sbr.rel (0) target = $region9
    $region8: #{tpu_custom_call.1} parent=1 // pred_region
      %s25 = ssub.s32 2048, 2048
      %26 = vsyncadd [#allocation5], %s25
      %s27 = sshll.u32 [#allocation4], 4
      %s28 = int_to_ptr.vmem [resolvable:$true] %s27
      %33 = dma.hbm_to_vmem [thread:$0]  %s1, 2048, %s28, [#allocation5], 128, 128, 8
    $region9: #{tpu_custom_call.1} parent=1 // pred_fallthru
      _
    // Predicated region
    $region10: #{tpu_custom_call.1} parent=1 // pred_check
      _
    $region11: #{tpu_custom_call.1} parent=1 // pred_check_branch
      %35 = sbr.rel (0) target = $region13
    $region12: #{tpu_custom_call.1} parent=1 // pred_region
      %s37 = ssub.s32 1024, 1024
      %38 = vsyncadd [#allocation5], %s37
      %s39 = sshll.u32 [#allocation6], 4
      %s40 = int_to_ptr.vmem [resolvable:$true] %s39
      %45 = dma.hbm_to_vmem [thread:$0]  %s2, 1024, %s40, [#allocation5], 64, 64, 4
    $region13: #{tpu_custom_call.1} parent=1 // pred_fallthru
      _
    // Predicated region
    $region14: #{tpu_custom_call.1} parent=1 // pred_check
      _
    $region15: #{tpu_custom_call.1} parent=1 // pred_check_branch
      %47 = sbr.rel (0) target = $region17
    $region16: #{tpu_custom_call.1} parent=1 // pred_region
      %48 = dma.done [#allocation3], 2048
    $region17: #{tpu_custom_call.1} parent=1 // pred_fallthru
      _
    // Predicated region
    $region18: #{tpu_custom_call.1} parent=1 // pred_check
      _
    $region19: #{tpu_custom_call.1} parent=1 // pred_check_branch
      %50 = sbr.rel (0) target = $region21
    $region20: #{tpu_custom_call.1} parent=1 // pred_region
      %51 = dma.done [#allocation5], 2048
    $region21: #{tpu_custom_call.1} parent=1 // pred_fallthru
      _
    // Predicated region
    $region22: #{tpu_custom_call.1} parent=1 // pred_check
      _
    $region23: #{tpu_custom_call.1} parent=1 // pred_check_branch
      %53 = sbr.rel (0) target = $region25
    $region24: #{tpu_custom_call.1} parent=1 // pred_region
      %54 = dma.done [#allocation5], 1024
    $region25: #{tpu_custom_call.1} parent=1 // pred_fallthru
      _
    %s56 = smul.u32 0, 128
    %v57 = vld [vmem:[#allocation2] sm:$0xff]
    %v58 = vld [vmem:[#allocation2 + $0x8] sm:$0xff]
    %v59 = vld [vmem:[#allocation2 + $0x10] sm:$0xff]
    %v60 = vld [vmem:[#allocation2 + $0x18] sm:$0xff]
    %v61 = vld [vmem:[#allocation2 + $0x20] sm:$0xff]
    %v62 = vld [vmem:[#allocation2 + $0x28] sm:$0xff]
    %v63 = vld [vmem:[#allocation2 + $0x30] sm:$0xff]
    %v64 = vld [vmem:[#allocation2 + $0x38] sm:$0xff]
    %v65 = vld [vmem:[#allocation2 + $0x40] sm:$0xff]
    %v66 = vld [vmem:[#allocation2 + $0x48] sm:$0xff]
    %v67 = vld [vmem:[#allocation2 + $0x50] sm:$0xff]
    %v68 = vld [vmem:[#allocation2 + $0x58] sm:$0xff]
    %v69 = vld [vmem:[#allocation2 + $0x60] sm:$0xff]
    %v70 = vld [vmem:[#allocation2 + $0x68] sm:$0xff]
    %v71 = vld [vmem:[#allocation2 + $0x70] sm:$0xff]
    %v72 = vld [vmem:[#allocation2 + $0x78] sm:$0xff]
    %v73 = vld [vmem:[#allocation4] sm:$0xff]
    %v74 = vld [vmem:[#allocation4 + $0x8] sm:$0xff]
    %v75 = vld [vmem:[#allocation4 + $0x10] sm:$0xff]
    %v76 = vld [vmem:[#allocation4 + $0x18] sm:$0xff]
    %v77 = vld [vmem:[#allocation4 + $0x20] sm:$0xff]
    %v78 = vld [vmem:[#allocation4 + $0x28] sm:$0xff]
    %v79 = vld [vmem:[#allocation4 + $0x30] sm:$0xff]
    %v80 = vld [vmem:[#allocation4 + $0x38] sm:$0xff]
    %v81 = vld [vmem:[#allocation4 + $0x40] sm:$0xff]
    %v82 = vld [vmem:[#allocation4 + $0x48] sm:$0xff]
    %v83 = vld [vmem:[#allocation4 + $0x50] sm:$0xff]
    %v84 = vld [vmem:[#allocation4 + $0x58] sm:$0xff]
    %v85 = vld [vmem:[#allocation4 + $0x60] sm:$0xff]
    %v86 = vld [vmem:[#allocation4 + $0x68] sm:$0xff]
    %v87 = vld [vmem:[#allocation4 + $0x70] sm:$0xff]
    %v88 = vld [vmem:[#allocation4 + $0x78] sm:$0xff]
    %v89 = vmul.f32 %v57, %v57
    %v90 = vmul.f32 %v58, %v58
    %v91 = vmul.f32 %v59, %v59
    %v92 = vmul.f32 %v60, %v60
    %v93 = vmul.f32 %v61, %v61
    %v94 = vmul.f32 %v62, %v62
    %v95 = vmul.f32 %v63, %v63
    %v96 = vmul.f32 %v64, %v64
    %v97 = vmul.f32 %v65, %v65
    %v98 = vmul.f32 %v66, %v66
    %v99 = vmul.f32 %v67, %v67
    %v100 = vmul.f32 %v68, %v68
    %v101 = vmul.f32 %v69, %v69
    %v102 = vmul.f32 %v70, %v70
    %v103 = vmul.f32 %v71, %v71
    %v104 = vmul.f32 %v72, %v72
    %105 = vadd.xlane.f32.xlu0 %v89
    %v106 = vpop.xlane.xlu0 %105
    %107 = vadd.xlane.f32.xlu0 %v90
    %v108 = vpop.xlane.xlu0 %107
    %109 = vadd.xlane.f32.xlu0 %v91
    %v110 = vpop.xlane.xlu0 %109
    %111 = vadd.xlane.f32.xlu0 %v92
    %v112 = vpop.xlane.xlu0 %111
    %113 = vadd.xlane.f32.xlu0 %v93
    %v114 = vpop.xlane.xlu0 %113
    %115 = vadd.xlane.f32.xlu0 %v94
    %v116 = vpop.xlane.xlu0 %115
    %117 = vadd.xlane.f32.xlu0 %v95
    %v118 = vpop.xlane.xlu0 %117
    %119 = vadd.xlane.f32.xlu0 %v96
    %v120 = vpop.xlane.xlu0 %119
    %121 = vadd.xlane.f32.xlu0 %v97
    %v122 = vpop.xlane.xlu0 %121
    %123 = vadd.xlane.f32.xlu0 %v98
    %v124 = vpop.xlane.xlu0 %123
    %125 = vadd.xlane.f32.xlu0 %v99
    %v126 = vpop.xlane.xlu0 %125
    %127 = vadd.xlane.f32.xlu0 %v100
    %v128 = vpop.xlane.xlu0 %127
    %129 = vadd.xlane.f32.xlu0 %v101
    %v130 = vpop.xlane.xlu0 %129
    %131 = vadd.xlane.f32.xlu0 %v102
    %v132 = vpop.xlane.xlu0 %131
    %133 = vadd.xlane.f32.xlu0 %v103
    %v134 = vpop.xlane.xlu0 %133
    %135 = vadd.xlane.f32.xlu0 %v104
    %v136 = vpop.xlane.xlu0 %135
    %v137 = vmul.f32 %v73, %v73
    %v138 = vmul.f32 %v74, %v74
    %v139 = vmul.f32 %v75, %v75
    %v140 = vmul.f32 %v76, %v76
    %v141 = vmul.f32 %v77, %v77
    %v142 = vmul.f32 %v78, %v78
    %v143 = vmul.f32 %v79, %v79
    %v144 = vmul.f32 %v80, %v80
    %v145 = vmul.f32 %v81, %v81
    %v146 = vmul.f32 %v82, %v82
    %v147 = vmul.f32 %v83, %v83
    %v148 = vmul.f32 %v84, %v84
    %v149 = vmul.f32 %v85, %v85
    %v150 = vmul.f32 %v86, %v86
    %v151 = vmul.f32 %v87, %v87
    %v152 = vmul.f32 %v88, %v88
    %153 = vadd.xlane.f32.xlu0 %v137
    %v154 = vpop.xlane.xlu0 %153
    %155 = vadd.xlane.f32.xlu0 %v138
    %v156 = vpop.xlane.xlu0 %155
    %157 = vadd.xlane.f32.xlu0 %v139
    %v158 = vpop.xlane.xlu0 %157
    %159 = vadd.xlane.f32.xlu0 %v140
    %v160 = vpop.xlane.xlu0 %159
    %161 = vadd.xlane.f32.xlu0 %v141
    %v162 = vpop.xlane.xlu0 %161
    %163 = vadd.xlane.f32.xlu0 %v142
    %v164 = vpop.xlane.xlu0 %163
    %165 = vadd.xlane.f32.xlu0 %v143
    %v166 = vpop.xlane.xlu0 %165
    %167 = vadd.xlane.f32.xlu0 %v144
    %v168 = vpop.xlane.xlu0 %167
    %169 = vadd.xlane.f32.xlu0 %v145
    %v170 = vpop.xlane.xlu0 %169
    %171 = vadd.xlane.f32.xlu0 %v146
    %v172 = vpop.xlane.xlu0 %171
    %173 = vadd.xlane.f32.xlu0 %v147
    %v174 = vpop.xlane.xlu0 %173
    %175 = vadd.xlane.f32.xlu0 %v148
    %v176 = vpop.xlane.xlu0 %175
    %177 = vadd.xlane.f32.xlu0 %v149
    %v178 = vpop.xlane.xlu0 %177
    %179 = vadd.xlane.f32.xlu0 %v150
    %v180 = vpop.xlane.xlu0 %179
    %181 = vadd.xlane.f32.xlu0 %v151
    %v182 = vpop.xlane.xlu0 %181
    %183 = vadd.xlane.f32.xlu0 %v152
    %v184 = vpop.xlane.xlu0 %183
    %v185 = vmul.f32 %v57, %v73
    %v186 = vmul.f32 %v58, %v74
    %v187 = vmul.f32 %v59, %v75
    %v188 = vmul.f32 %v60, %v76
    %v189 = vmul.f32 %v61, %v77
    %v190 = vmul.f32 %v62, %v78
    %v191 = vmul.f32 %v63, %v79
    %v192 = vmul.f32 %v64, %v80
    %v193 = vmul.f32 %v65, %v81
    %v194 = vmul.f32 %v66, %v82
    %v195 = vmul.f32 %v67, %v83
    %v196 = vmul.f32 %v68, %v84
    %v197 = vmul.f32 %v69, %v85
    %v198 = vmul.f32 %v70, %v86
    %v199 = vmul.f32 %v71, %v87
    %v200 = vmul.f32 %v72, %v88
    %201 = vadd.xlane.f32.xlu0 %v185
    %v202 = vpop.xlane.xlu0 %201
    %203 = vadd.xlane.f32.xlu0 %v186
    %v204 = vpop.xlane.xlu0 %203
    %205 = vadd.xlane.f32.xlu0 %v187
    %v206 = vpop.xlane.xlu0 %205
    %207 = vadd.xlane.f32.xlu0 %v188
    %v208 = vpop.xlane.xlu0 %207
    %209 = vadd.xlane.f32.xlu0 %v189
    %v210 = vpop.xlane.xlu0 %209
    %211 = vadd.xlane.f32.xlu0 %v190
    %v212 = vpop.xlane.xlu0 %211
    %213 = vadd.xlane.f32.xlu0 %v191
    %v214 = vpop.xlane.xlu0 %213
    %215 = vadd.xlane.f32.xlu0 %v192
    %v216 = vpop.xlane.xlu0 %215
    %217 = vadd.xlane.f32.xlu0 %v193
    %v218 = vpop.xlane.xlu0 %217
    %219 = vadd.xlane.f32.xlu0 %v194
    %v220 = vpop.xlane.xlu0 %219
    %221 = vadd.xlane.f32.xlu0 %v195
    %v222 = vpop.xlane.xlu0 %221
    %223 = vadd.xlane.f32.xlu0 %v196
    %v224 = vpop.xlane.xlu0 %223
    %225 = vadd.xlane.f32.xlu0 %v197
    %v226 = vpop.xlane.xlu0 %225
    %227 = vadd.xlane.f32.xlu0 %v198
    %v228 = vpop.xlane.xlu0 %227
    %229 = vadd.xlane.f32.xlu0 %v199
    %v230 = vpop.xlane.xlu0 %229
    %231 = vadd.xlane.f32.xlu0 %v200
    %v232 = vpop.xlane.xlu0 %231
    %v233 = vmul.f32 %v202, 14.285714
    %v234 = vmul.f32 %v204, 14.285714
    %v235 = vmul.f32 %v206, 14.285714
    %v236 = vmul.f32 %v208, 14.285714
    %v237 = vmul.f32 %v210, 14.285714
    %v238 = vmul.f32 %v212, 14.285714
    %v239 = vmul.f32 %v214, 14.285714
    %v240 = vmul.f32 %v216, 14.285714
    %v241 = vmul.f32 %v218, 14.285714
    %v242 = vmul.f32 %v220, 14.285714
    %v243 = vmul.f32 %v222, 14.285714
    %v244 = vmul.f32 %v224, 14.285714
    %v245 = vmul.f32 %v226, 14.285714
    %v246 = vmul.f32 %v228, 14.285714
    %v247 = vmul.f32 %v230, 14.285714
    %v248 = vmul.f32 %v232, 14.285714
    %v249 = vmul.f32 %v106, %v154
    %v250 = vmul.f32 %v108, %v156
    %v251 = vmul.f32 %v110, %v158
    %v252 = vmul.f32 %v112, %v160
    %v253 = vmul.f32 %v114, %v162
    %v254 = vmul.f32 %v116, %v164
    %v255 = vmul.f32 %v118, %v166
    %v256 = vmul.f32 %v120, %v168
    %v257 = vmul.f32 %v122, %v170
    %v258 = vmul.f32 %v124, %v172
    %v259 = vmul.f32 %v126, %v174
    %v260 = vmul.f32 %v128, %v176
    %v261 = vmul.f32 %v130, %v178
    %v262 = vmul.f32 %v132, %v180
    %v263 = vmul.f32 %v134, %v182
    %v264 = vmul.f32 %v136, %v184
    %v265 = vmax.f32 %v249, 1e-16
    %v266 = vmax.f32 %v250, 1e-16
    %v267 = vmax.f32 %v251, 1e-16
    %v268 = vmax.f32 %v252, 1e-16
    %v269 = vmax.f32 %v253, 1e-16
    %v270 = vmax.f32 %v254, 1e-16
    %v271 = vmax.f32 %v255, 1e-16
    %v272 = vmax.f32 %v256, 1e-16
    %v273 = vmax.f32 %v257, 1e-16
    %v274 = vmax.f32 %v258, 1e-16
    %v275 = vmax.f32 %v259, 1e-16
    %v276 = vmax.f32 %v260, 1e-16
    %v277 = vmax.f32 %v261, 1e-16
    %v278 = vmax.f32 %v262, 1e-16
    %v279 = vmax.f32 %v263, 1e-16
    %v280 = vmax.f32 %v264, 1e-16
    %v281 = vrsqrt.pop %v265
    %v282 = vrsqrt.pop %v266
    %v283 = vrsqrt.pop %v267
    %v284 = vrsqrt.pop %v268
    %v285 = vrsqrt.pop %v269
    %v286 = vrsqrt.pop %v270
    %v287 = vrsqrt.pop %v271
    %v288 = vrsqrt.pop %v272
    %v289 = vrsqrt.pop %v273
    %v290 = vrsqrt.pop %v274
    %v291 = vrsqrt.pop %v275
    %v292 = vrsqrt.pop %v276
    %v293 = vrsqrt.pop %v277
    %v294 = vrsqrt.pop %v278
    %v295 = vrsqrt.pop %v279
    %v296 = vrsqrt.pop %v280
    %v297 = vmul.f32 %v233, %v281
    %v298 = vmul.f32 %v234, %v282
    %v299 = vmul.f32 %v235, %v283
    %v300 = vmul.f32 %v236, %v284
    %v301 = vmul.f32 %v237, %v285
    %v302 = vmul.f32 %v238, %v286
    %v303 = vmul.f32 %v239, %v287
    %v304 = vmul.f32 %v240, %v288
    %v305 = vmul.f32 %v241, %v289
    %v306 = vmul.f32 %v242, %v290
    %v307 = vmul.f32 %v243, %v291
    %v308 = vmul.f32 %v244, %v292
    %v309 = vmul.f32 %v245, %v293
    %v310 = vmul.f32 %v246, %v294
    %v311 = vmul.f32 %v247, %v295
    %v312 = vmul.f32 %v248, %v296
    %v313 = vmax.f32 %v106, 1e-16
    %v314 = vmax.f32 %v108, 1e-16
    %v315 = vmax.f32 %v110, 1e-16
    %v316 = vmax.f32 %v112, 1e-16
    %v317 = vmax.f32 %v114, 1e-16
    %v318 = vmax.f32 %v116, 1e-16
    %v319 = vmax.f32 %v118, 1e-16
    %v320 = vmax.f32 %v120, 1e-16
    %v321 = vmax.f32 %v122, 1e-16
    %v322 = vmax.f32 %v124, 1e-16
    %v323 = vmax.f32 %v126, 1e-16
    %v324 = vmax.f32 %v128, 1e-16
    %v325 = vmax.f32 %v130, 1e-16
    %v326 = vmax.f32 %v132, 1e-16
    %v327 = vmax.f32 %v134, 1e-16
    %v328 = vmax.f32 %v136, 1e-16
    %v329 = vrsqrt.pop %v313
    %v330 = vrsqrt.pop %v314
    %v331 = vrsqrt.pop %v315
    %v332 = vrsqrt.pop %v316
    %v333 = vrsqrt.pop %v317
    %v334 = vrsqrt.pop %v318
    %v335 = vrsqrt.pop %v319
    %v336 = vrsqrt.pop %v320
    %v337 = vrsqrt.pop %v321
    %v338 = vrsqrt.pop %v322
    %v339 = vrsqrt.pop %v323
    %v340 = vrsqrt.pop %v324
    %v341 = vrsqrt.pop %v325
    %v342 = vrsqrt.pop %v326
    %v343 = vrsqrt.pop %v327
    %v344 = vrsqrt.pop %v328
    %v345 = vmul.f32 %v329, 14.285714
    %v346 = vmul.f32 %v330, 14.285714
    %v347 = vmul.f32 %v331, 14.285714
    %v348 = vmul.f32 %v332, 14.285714
    %v349 = vmul.f32 %v333, 14.285714
    %v350 = vmul.f32 %v334, 14.285714
    %v351 = vmul.f32 %v335, 14.285714
    %v352 = vmul.f32 %v336, 14.285714
    %v353 = vmul.f32 %v337, 14.285714
    %v354 = vmul.f32 %v338, 14.285714
    %v355 = vmul.f32 %v339, 14.285714
    %v356 = vmul.f32 %v340, 14.285714
    %v357 = vmul.f32 %v341, 14.285714
    %v358 = vmul.f32 %v342, 14.285714
    %v359 = vmul.f32 %v343, 14.285714
    %v360 = vmul.f32 %v344, 14.285714
    %v361 = vmul.f32 %v57, %v345
    %v362 = vmul.f32 %v58, %v346
    %v363 = vmul.f32 %v59, %v347
    %v364 = vmul.f32 %v60, %v348
    %v365 = vmul.f32 %v61, %v349
    %v366 = vmul.f32 %v62, %v350
    %v367 = vmul.f32 %v63, %v351
    %v368 = vmul.f32 %v64, %v352
    %v369 = vmul.f32 %v65, %v353
    %v370 = vmul.f32 %v66, %v354
    %v371 = vmul.f32 %v67, %v355
    %v372 = vmul.f32 %v68, %v356
    %v373 = vmul.f32 %v69, %v357
    %v374 = vmul.f32 %v70, %v358
    %v375 = vmul.f32 %v71, %v359
    %v376 = vmul.f32 %v72, %v360
    %v377 = vpack.c.bf16 %v362, %v361
    %v378 = vpack.c.bf16 %v364, %v363
    %v379 = vpack.c.bf16 %v366, %v365
    %v380 = vpack.c.bf16 %v368, %v367
    %v381 = vpack.c.bf16 %v370, %v369
    %v382 = vpack.c.bf16 %v372, %v371
    %v383 = vpack.c.bf16 %v374, %v373
    %v384 = vpack.c.bf16 %v376, %v375
    %v385 = vld [vmem:[#allocation6] sm:$0xf]
    %v386 = vld [vmem:[#allocation6 + $0x4] sm:$0xf]
    %v387 = vld [vmem:[#allocation6 + $0x8] sm:$0xf]
    %v388 = vld [vmem:[#allocation6 + $0xc] sm:$0xf]
    %v389 = vld [vmem:[#allocation6 + $0x10] sm:$0xf]
    %v390 = vld [vmem:[#allocation6 + $0x14] sm:$0xf]
    %v391 = vld [vmem:[#allocation6 + $0x18] sm:$0xf]
    %v392 = vld [vmem:[#allocation6 + $0x1c] sm:$0xf]
    %v393 = vld [vmem:[#allocation6 + $0x20] sm:$0xf]
    %v394 = vld [vmem:[#allocation6 + $0x24] sm:$0xf]
    %v395 = vld [vmem:[#allocation6 + $0x28] sm:$0xf]
    %v396 = vld [vmem:[#allocation6 + $0x2c] sm:$0xf]
    %v397 = vld [vmem:[#allocation6 + $0x30] sm:$0xf]
    %v398 = vld [vmem:[#allocation6 + $0x34] sm:$0xf]
    %v399 = vld [vmem:[#allocation6 + $0x38] sm:$0xf]
    %v400 = vld [vmem:[#allocation6 + $0x3c] sm:$0xf]
    %v417 = vunpack.c.l.b16 %v385
    %v418 = vunpack.c.l.b16 %v386
    %v419 = vunpack.c.l.b16 %v387
    %v420 = vunpack.c.l.b16 %v388
    %v421 = vunpack.c.l.b16 %v389
    %v422 = vunpack.c.l.b16 %v390
    %v423 = vunpack.c.l.b16 %v391
    %v424 = vunpack.c.l.b16 %v392
    %v425 = vunpack.c.l.b16 %v393
    %v426 = vunpack.c.l.b16 %v394
    %v427 = vunpack.c.l.b16 %v395
    %v428 = vunpack.c.l.b16 %v396
    %v429 = vunpack.c.l.b16 %v397
    %v430 = vunpack.c.l.b16 %v398
    %v431 = vunpack.c.l.b16 %v399
    %v432 = vunpack.c.l.b16 %v400
    %v433 = vpack.c.b16 %v418, %v417
    %v434 = vpack.c.b16 %v420, %v419
    %v435 = vpack.c.b16 %v422, %v421
    %v436 = vpack.c.b16 %v424, %v423
    %v437 = vpack.c.b16 %v426, %v425
    %v438 = vpack.c.b16 %v428, %v427
    %v439 = vpack.c.b16 %v430, %v429
    %v440 = vpack.c.b16 %v432, %v431
    %449 = vmatprep.subr.bf16.mxu0 0
    %450 = vmatpush1.bf16.msra.mxu0 %v440
    %451 = vmatprep.subr.bf16.mxu0 0
    %452 = vmatpush1.bf16.msra.mxu0 %v439
    %453 = vmatprep.subr.bf16.mxu0 0
    %454 = vmatpush1.bf16.msra.mxu0 %v438
    %455 = vmatprep.subr.bf16.mxu0 0
    %456 = vmatpush1.bf16.msra.mxu0 %v437
    %457 = vmatprep.subr.bf16.mxu0 0
    %458 = vmatpush1.bf16.msra.mxu0 %v436
    %459 = vmatprep.subr.bf16.mxu0 0
    %460 = vmatpush1.bf16.msra.mxu0 %v435
    %461 = vmatprep.subr.bf16.mxu0 0
    %462 = vmatpush1.bf16.msra.mxu0 %v434
    %463 = vmatprep.subr.bf16.mxu0 0
    %464 = vmatpush1.bf16.msra.mxu0 %v433
    %465 = vmatprep.subr.bf16.mxu0 0
    %466 = vmatpush2.bf16.msra.mxu0 0
    %467 = vmatprep.subr.bf16.mxu0 0
    %468 = vmatpush2.bf16.msra.mxu0 0
    %469 = vmatprep.subr.bf16.mxu0 0
    %470 = vmatpush2.bf16.msra.mxu0 0
    %471 = vmatprep.subr.bf16.mxu0 0
    %472 = vmatpush2.bf16.msra.mxu0 0
    %473 = vmatprep.subr.bf16.mxu0 0
    %474 = vmatpush2.bf16.msra.mxu0 0
    %475 = vmatprep.subr.bf16.mxu0 0
    %476 = vmatpush2.bf16.msra.mxu0 0
    %477 = vmatprep.subr.bf16.mxu0 0
    %478 = vmatpush2.bf16.msra.mxu0 0
    %479 = vmatprep.subr.bf16.mxu0 0
    %480 = vmatpush2.bf16.msra.mxu0 0
    %481 = vmatprep.mubr.bf16.mxu0 0
    %482 = vmatmul.mubr.bf16.gmra.mxu0 %v377
    %v483 = vpop.f32.mrf.mxu0
    %v484 = vadd.f32 0.0, %v483
    %v485 = vpop.f32.mrf.mxu0
    %v486 = vpop.f32.mrf.mxu0
    %v487 = vadd.f32 0.0, %v486
    %v488 = vpop.f32.mrf.mxu0
    %489 = vmatprep.mubr.bf16.mxu0 0
    %490 = vmatmul.mubr.bf16.gmra.mxu0 %v378
    %v491 = vpop.f32.mrf.mxu0
    %v492 = vadd.f32 0.0, %v491
    %v493 = vpop.f32.mrf.mxu0
    %v494 = vpop.f32.mrf.mxu0
    %v495 = vadd.f32 0.0, %v494
    %v496 = vpop.f32.mrf.mxu0
    %497 = vmatprep.mubr.bf16.mxu0 0
    %498 = vmatmul.mubr.bf16.gmra.mxu0 %v379
    %v499 = vpop.f32.mrf.mxu0
    %v500 = vadd.f32 0.0, %v499
    %v501 = vpop.f32.mrf.mxu0
    %v502 = vpop.f32.mrf.mxu0
    %v503 = vadd.f32 0.0, %v502
    %v504 = vpop.f32.mrf.mxu0
    %505 = vmatprep.mubr.bf16.mxu0 0
    %506 = vmatmul.mubr.bf16.gmra.mxu0 %v380
    %v507 = vpop.f32.mrf.mxu0
    %v508 = vadd.f32 0.0, %v507
    %v509 = vpop.f32.mrf.mxu0
    %v510 = vpop.f32.mrf.mxu0
    %v511 = vadd.f32 0.0, %v510
    %v512 = vpop.f32.mrf.mxu0
    %513 = vmatprep.mubr.bf16.mxu0 0
    %514 = vmatmul.mubr.bf16.gmra.mxu0 %v381
    %v515 = vpop.f32.mrf.mxu0
    %v516 = vadd.f32 0.0, %v515
    %v517 = vpop.f32.mrf.mxu0
    %v518 = vpop.f32.mrf.mxu0
    %v519 = vadd.f32 0.0, %v518
    %v520 = vpop.f32.mrf.mxu0
    %521 = vmatprep.mubr.bf16.mxu0 0
    %522 = vmatmul.mubr.bf16.gmra.mxu0 %v382
    %v523 = vpop.f32.mrf.mxu0
    %v524 = vadd.f32 0.0, %v523
    %v525 = vpop.f32.mrf.mxu0
    %v526 = vpop.f32.mrf.mxu0
    %v527 = vadd.f32 0.0, %v526
    %v528 = vpop.f32.mrf.mxu0
    %529 = vmatprep.mubr.bf16.mxu0 0
    %530 = vmatmul.mubr.bf16.gmra.mxu0 %v383
    %v531 = vpop.f32.mrf.mxu0
    %v532 = vadd.f32 0.0, %v531
    %v533 = vpop.f32.mrf.mxu0
    %v534 = vpop.f32.mrf.mxu0
    %v535 = vadd.f32 0.0, %v534
    %v536 = vpop.f32.mrf.mxu0
    %537 = vmatprep.mubr.bf16.mxu0 0
    %538 = vmatmul.mubr.bf16.gmra.mxu0 %v384
    %v539 = vpop.f32.mrf.mxu0
    %v540 = vadd.f32 0.0, %v539
    %v541 = vpop.f32.mrf.mxu0
    %v542 = vpop.f32.mrf.mxu0
    %v543 = vadd.f32 0.0, %v542
    %v544 = vpop.f32.mrf.mxu0
    %545 = vdwg.mxu0
    %v546 = vlaneseq
    %v547 = vand.u32 %v546, 127
    %v548 = vlaneseq
    %v549 = vshrl.u32 %v548, 7
    %v550 = vadd.s32 %v549, 8
    %v551 = vadd.s32 %v549, 16
    %v552 = vadd.s32 %v549, 24
    %v553 = vadd.s32 %v549, 32
    %v554 = vadd.s32 %v549, 40
    %v555 = vadd.s32 %v549, 48
    %v556 = vadd.s32 %v549, 56
    %v557 = vadd.s32 %v549, 64
    %v558 = vadd.s32 %v549, 72
    %v559 = vadd.s32 %v549, 80
    %v560 = vadd.s32 %v549, 88
    %v561 = vadd.s32 %v549, 96
    %v562 = vadd.s32 %v549, 104
    %v563 = vadd.s32 %v549, 112
    %v564 = vadd.s32 %v549, 120
    %v565 = vstv %s56
    %v566 = vadd.s32 %v565, %v549
    %v567 = vadd.s32 %v565, %v550
    %v568 = vadd.s32 %v565, %v551
    %v569 = vadd.s32 %v565, %v552
    %v570 = vadd.s32 %v565, %v553
    %v571 = vadd.s32 %v565, %v554
    %v572 = vadd.s32 %v565, %v555
    %v573 = vadd.s32 %v565, %v556
    %v574 = vadd.s32 %v565, %v557
    %v575 = vadd.s32 %v565, %v558
    %v576 = vadd.s32 %v565, %v559
    %v577 = vadd.s32 %v565, %v560
    %v578 = vadd.s32 %v565, %v561
    %v579 = vadd.s32 %v565, %v562
    %v580 = vadd.s32 %v565, %v563
    %v581 = vadd.s32 %v565, %v564
    %vm582 = vcmp.eq.s32.totalorder %v547, %v566
    %vm583 = vcmp.eq.s32.totalorder %v547, %v567
    %vm584 = vcmp.eq.s32.totalorder %v547, %v568
    %vm585 = vcmp.eq.s32.totalorder %v547, %v569
    %vm586 = vcmp.eq.s32.totalorder %v547, %v570
    %vm587 = vcmp.eq.s32.totalorder %v547, %v571
    %vm588 = vcmp.eq.s32.totalorder %v547, %v572
    %vm589 = vcmp.eq.s32.totalorder %v547, %v573
    %vm590 = vcmp.eq.s32.totalorder %v547, %v574
    %vm591 = vcmp.eq.s32.totalorder %v547, %v575
    %vm592 = vcmp.eq.s32.totalorder %v547, %v576
    %vm593 = vcmp.eq.s32.totalorder %v547, %v577
    %vm594 = vcmp.eq.s32.totalorder %v547, %v578
    %vm595 = vcmp.eq.s32.totalorder %v547, %v579
    %vm596 = vcmp.eq.s32.totalorder %v547, %v580
    %vm597 = vcmp.eq.s32.totalorder %v547, %v581
    %v598 = vsel %vm582, -142.85715, %v484
    %v599 = vsel %vm583, -142.85715, %v487
    %v600 = vsel %vm584, -142.85715, %v492
    %v601 = vsel %vm585, -142.85715, %v495
    %v602 = vsel %vm586, -142.85715, %v500
    %v603 = vsel %vm587, -142.85715, %v503
    %v604 = vsel %vm588, -142.85715, %v508
    %v605 = vsel %vm589, -142.85715, %v511
    %v606 = vsel %vm590, -142.85715, %v516
    %v607 = vsel %vm591, -142.85715, %v519
    %v608 = vsel %vm592, -142.85715, %v524
    %v609 = vsel %vm593, -142.85715, %v527
    %v610 = vsel %vm594, -142.85715, %v532
    %v611 = vsel %vm595, -142.85715, %v535
    %v612 = vsel %vm596, -142.85715, %v540
    %v613 = vsel %vm597, -142.85715, %v543
    %614 = vmax.xlane.f32.xlu0 %v598
    %v615 = vpop.xlane.xlu0 %614
    %616 = vmax.xlane.f32.xlu0 %v599
    %v617 = vpop.xlane.xlu0 %616
    %618 = vmax.xlane.f32.xlu0 %v600
    %v619 = vpop.xlane.xlu0 %618
    %620 = vmax.xlane.f32.xlu0 %v601
    %v621 = vpop.xlane.xlu0 %620
    %622 = vmax.xlane.f32.xlu0 %v602
    %v623 = vpop.xlane.xlu0 %622
    %624 = vmax.xlane.f32.xlu0 %v603
    %v625 = vpop.xlane.xlu0 %624
    %626 = vmax.xlane.f32.xlu0 %v604
    %v627 = vpop.xlane.xlu0 %626
    %628 = vmax.xlane.f32.xlu0 %v605
    %v629 = vpop.xlane.xlu0 %628
    %630 = vmax.xlane.f32.xlu0 %v606
    %v631 = vpop.xlane.xlu0 %630
    %632 = vmax.xlane.f32.xlu0 %v607
    %v633 = vpop.xlane.xlu0 %632
    %634 = vmax.xlane.f32.xlu0 %v608
    %v635 = vpop.xlane.xlu0 %634
    %636 = vmax.xlane.f32.xlu0 %v609
    %v637 = vpop.xlane.xlu0 %636
    %638 = vmax.xlane.f32.xlu0 %v610
    %v639 = vpop.xlane.xlu0 %638
    %640 = vmax.xlane.f32.xlu0 %v611
    %v641 = vpop.xlane.xlu0 %640
    %642 = vmax.xlane.f32.xlu0 %v612
    %v643 = vpop.xlane.xlu0 %642
    %644 = vmax.xlane.f32.xlu0 %v613
    %v645 = vpop.xlane.xlu0 %644
    %v646 = vmax.f32 %v615, %v297
    %v647 = vmax.f32 %v617, %v298
    %v648 = vmax.f32 %v619, %v299
    %v649 = vmax.f32 %v621, %v300
    %v650 = vmax.f32 %v623, %v301
    %v651 = vmax.f32 %v625, %v302
    %v652 = vmax.f32 %v627, %v303
    %v653 = vmax.f32 %v629, %v304
    %v654 = vmax.f32 %v631, %v305
    %v655 = vmax.f32 %v633, %v306
    %v656 = vmax.f32 %v635, %v307
    %v657 = vmax.f32 %v637, %v308
    %v658 = vmax.f32 %v639, %v309
    %v659 = vmax.f32 %v641, %v310
    %v660 = vmax.f32 %v643, %v311
    %v661 = vmax.f32 %v645, %v312
    %v662 = vsub.f32 %v598, %v646
    %v663 = vsub.f32 %v599, %v647
    %v664 = vsub.f32 %v600, %v648
    %v665 = vsub.f32 %v601, %v649
    %v666 = vsub.f32 %v602, %v650
    %v667 = vsub.f32 %v603, %v651
    %v668 = vsub.f32 %v604, %v652
    %v669 = vsub.f32 %v605, %v653
    %v670 = vsub.f32 %v606, %v654
    %v671 = vsub.f32 %v607, %v655
    %v672 = vsub.f32 %v608, %v656
    %v673 = vsub.f32 %v609, %v657
    %v674 = vsub.f32 %v610, %v658
    %v675 = vsub.f32 %v611, %v659
    %v676 = vsub.f32 %v612, %v660
    %v677 = vsub.f32 %v613, %v661
    %v678 = vmul.f32 %v662, 1.442695
    %v679 = vpow.pop %v678
    %v680 = vmul.f32 %v663, 1.442695
    %v681 = vpow.pop %v680
    %v682 = vmul.f32 %v664, 1.442695
    %v683 = vpow.pop %v682
    %v684 = vmul.f32 %v665, 1.442695
    %v685 = vpow.pop %v684
    %v686 = vmul.f32 %v666, 1.442695
    %v687 = vpow.pop %v686
    %v688 = vmul.f32 %v667, 1.442695
    %v689 = vpow.pop %v688
    %v690 = vmul.f32 %v668, 1.442695
    %v691 = vpow.pop %v690
    %v692 = vmul.f32 %v669, 1.442695
    %v693 = vpow.pop %v692
    %v694 = vmul.f32 %v670, 1.442695
    %v695 = vpow.pop %v694
    %v696 = vmul.f32 %v671, 1.442695
    %v697 = vpow.pop %v696
    %v698 = vmul.f32 %v672, 1.442695
    %v699 = vpow.pop %v698
    %v700 = vmul.f32 %v673, 1.442695
    %v701 = vpow.pop %v700
    %v702 = vmul.f32 %v674, 1.442695
    %v703 = vpow.pop %v702
    %v704 = vmul.f32 %v675, 1.442695
    %v705 = vpow.pop %v704
    %v706 = vmul.f32 %v676, 1.442695
    %v707 = vpow.pop %v706
    %v708 = vmul.f32 %v677, 1.442695
    %v709 = vpow.pop %v708
    %710 = vadd.xlane.f32.xlu0 %v679
    %v711 = vpop.xlane.xlu0 %710
    %712 = vadd.xlane.f32.xlu0 %v681
    %v713 = vpop.xlane.xlu0 %712
    %714 = vadd.xlane.f32.xlu0 %v683
    %v715 = vpop.xlane.xlu0 %714
    %716 = vadd.xlane.f32.xlu0 %v685
    %v717 = vpop.xlane.xlu0 %716
    %718 = vadd.xlane.f32.xlu0 %v687
    %v719 = vpop.xlane.xlu0 %718
    %720 = vadd.xlane.f32.xlu0 %v689
    %v721 = vpop.xlane.xlu0 %720
    %722 = vadd.xlane.f32.xlu0 %v691
    %v723 = vpop.xlane.xlu0 %722
    %724 = vadd.xlane.f32.xlu0 %v693
    %v725 = vpop.xlane.xlu0 %724
    %726 = vadd.xlane.f32.xlu0 %v695
    %v727 = vpop.xlane.xlu0 %726
    %728 = vadd.xlane.f32.xlu0 %v697
    %v729 = vpop.xlane.xlu0 %728
    %730 = vadd.xlane.f32.xlu0 %v699
    %v731 = vpop.xlane.xlu0 %730
    %732 = vadd.xlane.f32.xlu0 %v701
    %v733 = vpop.xlane.xlu0 %732
    %734 = vadd.xlane.f32.xlu0 %v703
    %v735 = vpop.xlane.xlu0 %734
    %736 = vadd.xlane.f32.xlu0 %v705
    %v737 = vpop.xlane.xlu0 %736
    %738 = vadd.xlane.f32.xlu0 %v707
    %v739 = vpop.xlane.xlu0 %738
    %740 = vadd.xlane.f32.xlu0 %v709
    %v741 = vpop.xlane.xlu0 %740
    %v742 = vsub.f32 %v297, %v646
    %v743 = vsub.f32 %v298, %v647
    %v744 = vsub.f32 %v299, %v648
    %v745 = vsub.f32 %v300, %v649
    %v746 = vsub.f32 %v301, %v650
    %v747 = vsub.f32 %v302, %v651
    %v748 = vsub.f32 %v303, %v652
    %v749 = vsub.f32 %v304, %v653
    %v750 = vsub.f32 %v305, %v654
    %v751 = vsub.f32 %v306, %v655
    %v752 = vsub.f32 %v307, %v656
    %v753 = vsub.f32 %v308, %v657
    %v754 = vsub.f32 %v309, %v658
    %v755 = vsub.f32 %v310, %v659
    %v756 = vsub.f32 %v311, %v660
    %v757 = vsub.f32 %v312, %v661
    %v758 = vmul.f32 %v742, 1.442695
    %v759 = vpow.pop %v758
    %v760 = vmul.f32 %v743, 1.442695
    %v761 = vpow.pop %v760
    %v762 = vmul.f32 %v744, 1.442695
    %v763 = vpow.pop %v762
    %v764 = vmul.f32 %v745, 1.442695
    %v765 = vpow.pop %v764
    %v766 = vmul.f32 %v746, 1.442695
    %v767 = vpow.pop %v766
    %v768 = vmul.f32 %v747, 1.442695
    %v769 = vpow.pop %v768
    %v770 = vmul.f32 %v748, 1.442695
    %v771 = vpow.pop %v770
    %v772 = vmul.f32 %v749, 1.442695
    %v773 = vpow.pop %v772
    %v774 = vmul.f32 %v750, 1.442695
    %v775 = vpow.pop %v774
    %v776 = vmul.f32 %v751, 1.442695
    %v777 = vpow.pop %v776
    %v778 = vmul.f32 %v752, 1.442695
    %v779 = vpow.pop %v778
    %v780 = vmul.f32 %v753, 1.442695
    %v781 = vpow.pop %v780
    %v782 = vmul.f32 %v754, 1.442695
    %v783 = vpow.pop %v782
    %v784 = vmul.f32 %v755, 1.442695
    %v785 = vpow.pop %v784
    %v786 = vmul.f32 %v756, 1.442695
    %v787 = vpow.pop %v786
    %v788 = vmul.f32 %v757, 1.442695
    %v789 = vpow.pop %v788
    %v790 = vadd.f32 %v711, %v759
    %v791 = vadd.f32 %v713, %v761
    %v792 = vadd.f32 %v715, %v763
    %v793 = vadd.f32 %v717, %v765
    %v794 = vadd.f32 %v719, %v767
    %v795 = vadd.f32 %v721, %v769
    %v796 = vadd.f32 %v723, %v771
    %v797 = vadd.f32 %v725, %v773
    %v798 = vadd.f32 %v727, %v775
    %v799 = vadd.f32 %v729, %v777
    %v800 = vadd.f32 %v731, %v779
    %v801 = vadd.f32 %v733, %v781
    %v802 = vadd.f32 %v735, %v783
    %v803 = vadd.f32 %v737, %v785
    %v804 = vadd.f32 %v739, %v787
    %v805 = vadd.f32 %v741, %v789
    %v806 = vsub.f32 0.0, %v646
    %v807 = vsub.f32 0.0, %v647
    %v808 = vsub.f32 0.0, %v648
    %v809 = vsub.f32 0.0, %v649
    %v810 = vsub.f32 0.0, %v650
    %v811 = vsub.f32 0.0, %v651
    %v812 = vsub.f32 0.0, %v652
    %v813 = vsub.f32 0.0, %v653
    %v814 = vsub.f32 0.0, %v654
    %v815 = vsub.f32 0.0, %v655
    %v816 = vsub.f32 0.0, %v656
    %v817 = vsub.f32 0.0, %v657
    %v818 = vsub.f32 0.0, %v658
    %v819 = vsub.f32 0.0, %v659
    %v820 = vsub.f32 0.0, %v660
    %v821 = vsub.f32 0.0, %v661
    %v822 = vmul.f32 %v806, 1.442695
    %v823 = vpow.pop %v822
    %v824 = vmul.f32 %v807, 1.442695
    %v825 = vpow.pop %v824
    %v826 = vmul.f32 %v808, 1.442695
    %v827 = vpow.pop %v826
    %v828 = vmul.f32 %v809, 1.442695
    %v829 = vpow.pop %v828
    %v830 = vmul.f32 %v810, 1.442695
    %v831 = vpow.pop %v830
    %v832 = vmul.f32 %v811, 1.442695
    %v833 = vpow.pop %v832
    %v834 = vmul.f32 %v812, 1.442695
    %v835 = vpow.pop %v834
    %v836 = vmul.f32 %v813, 1.442695
    %v837 = vpow.pop %v836
    %v838 = vmul.f32 %v814, 1.442695
    %v839 = vpow.pop %v838
    %v840 = vmul.f32 %v815, 1.442695
    %v841 = vpow.pop %v840
    %v842 = vmul.f32 %v816, 1.442695
    %v843 = vpow.pop %v842
    %v844 = vmul.f32 %v817, 1.442695
    %v845 = vpow.pop %v844
    %v846 = vmul.f32 %v818, 1.442695
    %v847 = vpow.pop %v846
    %v848 = vmul.f32 %v819, 1.442695
    %v849 = vpow.pop %v848
    %v850 = vmul.f32 %v820, 1.442695
    %v851 = vpow.pop %v850
    %v852 = vmul.f32 %v821, 1.442695
    %v853 = vpow.pop %v852
    %v854 = vmul.f32 %v823, 120.0
    %v855 = vmul.f32 %v825, 120.0
    %v856 = vmul.f32 %v827, 120.0
    %v857 = vmul.f32 %v829, 120.0
    %v858 = vmul.f32 %v831, 120.0
    %v859 = vmul.f32 %v833, 120.0
    %v860 = vmul.f32 %v835, 120.0
    %v861 = vmul.f32 %v837, 120.0
    %v862 = vmul.f32 %v839, 120.0
    %v863 = vmul.f32 %v841, 120.0
    %v864 = vmul.f32 %v843, 120.0
    %v865 = vmul.f32 %v845, 120.0
    %v866 = vmul.f32 %v847, 120.0
    %v867 = vmul.f32 %v849, 120.0
    %v868 = vmul.f32 %v851, 120.0
    %v869 = vmul.f32 %v853, 120.0
    %v870 = vsub.f32 %v790, %v854
    %v871 = vsub.f32 %v791, %v855
    %v872 = vsub.f32 %v792, %v856
    %v873 = vsub.f32 %v793, %v857
    %v874 = vsub.f32 %v794, %v858
    %v875 = vsub.f32 %v795, %v859
    %v876 = vsub.f32 %v796, %v860
    %v877 = vsub.f32 %v797, %v861
    %v878 = vsub.f32 %v798, %v862
    %v879 = vsub.f32 %v799, %v863
    %v880 = vsub.f32 %v800, %v864
    %v881 = vsub.f32 %v801, %v865
    %v882 = vsub.f32 %v802, %v866
    %v883 = vsub.f32 %v803, %v867
    %v884 = vsub.f32 %v804, %v868
    %v885 = vsub.f32 %v805, %v869
    %v886 = vlog2.pop %v870
    %v887 = vmul.f32 %v886, 0.6931472
    %v888 = vlog2.pop %v871
    %v889 = vmul.f32 %v888, 0.6931472
    %v890 = vlog2.pop %v872
    %v891 = vmul.f32 %v890, 0.6931472
    %v892 = vlog2.pop %v873
    %v893 = vmul.f32 %v892, 0.6931472
    %v894 = vlog2.pop %v874
    %v895 = vmul.f32 %v894, 0.6931472
    %v896 = vlog2.pop %v875
    %v897 = vmul.f32 %v896, 0.6931472
    %v898 = vlog2.pop %v876
    %v899 = vmul.f32 %v898, 0.6931472
    %v900 = vlog2.pop %v877
    %v901 = vmul.f32 %v900, 0.6931472
    %v902 = vlog2.pop %v878
    %v903 = vmul.f32 %v902, 0.6931472
    %v904 = vlog2.pop %v879
    %v905 = vmul.f32 %v904, 0.6931472
    %v906 = vlog2.pop %v880
    %v907 = vmul.f32 %v906, 0.6931472
    %v908 = vlog2.pop %v881
    %v909 = vmul.f32 %v908, 0.6931472
    %v910 = vlog2.pop %v882
    %v911 = vmul.f32 %v910, 0.6931472
    %v912 = vlog2.pop %v883
    %v913 = vmul.f32 %v912, 0.6931472
    %v914 = vlog2.pop %v884
    %v915 = vmul.f32 %v914, 0.6931472
    %v916 = vlog2.pop %v885
    %v917 = vmul.f32 %v916, 0.6931472
    %v918 = vadd.f32 %v646, %v887
    %v919 = vadd.f32 %v647, %v889
    %v920 = vadd.f32 %v648, %v891
    %v921 = vadd.f32 %v649, %v893
    %v922 = vadd.f32 %v650, %v895
    %v923 = vadd.f32 %v651, %v897
    %v924 = vadd.f32 %v652, %v899
    %v925 = vadd.f32 %v653, %v901
    %v926 = vadd.f32 %v654, %v903
    %v927 = vadd.f32 %v655, %v905
    %v928 = vadd.f32 %v656, %v907
    %v929 = vadd.f32 %v657, %v909
    %v930 = vadd.f32 %v658, %v911
    %v931 = vadd.f32 %v659, %v913
    %v932 = vadd.f32 %v660, %v915
    %v933 = vadd.f32 %v661, %v917
    %v934 = vsub.f32 %v918, %v297
    %v935 = vsub.f32 %v919, %v298
    %v936 = vsub.f32 %v920, %v299
    %v937 = vsub.f32 %v921, %v300
    %v938 = vsub.f32 %v922, %v301
    %v939 = vsub.f32 %v923, %v302
    %v940 = vsub.f32 %v924, %v303
    %v941 = vsub.f32 %v925, %v304
    %v942 = vsub.f32 %v926, %v305
    %v943 = vsub.f32 %v927, %v306
    %v944 = vsub.f32 %v928, %v307
    %v945 = vsub.f32 %v929, %v308
    %v946 = vsub.f32 %v930, %v309
    %v947 = vsub.f32 %v931, %v310
    %v948 = vsub.f32 %v932, %v311
    %v949 = vsub.f32 %v933, %v312
    %vm950 = vcmask 7168
    %951 = vst.msk [vmem:[%s3] sm:$0xff] %vm950, %v934
    %952 = vst.msk [vmem:[%s3 + $0x8] sm:$0xff] %vm950, %v935
    %953 = vst.msk [vmem:[%s3 + $0x10] sm:$0xff] %vm950, %v936
    %954 = vst.msk [vmem:[%s3 + $0x18] sm:$0xff] %vm950, %v937
    %955 = vst.msk [vmem:[%s3 + $0x20] sm:$0xff] %vm950, %v938
    %956 = vst.msk [vmem:[%s3 + $0x28] sm:$0xff] %vm950, %v939
    %957 = vst.msk [vmem:[%s3 + $0x30] sm:$0xff] %vm950, %v940
    %958 = vst.msk [vmem:[%s3 + $0x38] sm:$0xff] %vm950, %v941
    %959 = vst.msk [vmem:[%s3 + $0x40] sm:$0xff] %vm950, %v942
    %960 = vst.msk [vmem:[%s3 + $0x48] sm:$0xff] %vm950, %v943
    %961 = vst.msk [vmem:[%s3 + $0x50] sm:$0xff] %vm950, %v944
    %962 = vst.msk [vmem:[%s3 + $0x58] sm:$0xff] %vm950, %v945
    %963 = vst.msk [vmem:[%s3 + $0x60] sm:$0xff] %vm950, %v946
    %964 = vst.msk [vmem:[%s3 + $0x68] sm:$0xff] %vm950, %v947
    %965 = vst.msk [vmem:[%s3 + $0x70] sm:$0xff] %vm950, %v948
    %966 = vst.msk [vmem:[%s3 + $0x78] sm:$0xff] %vm950, %v949
    // Predicated region
    $region26: #{tpu_custom_call.1} parent=1 // pred_check
      _
    $region27: #{tpu_custom_call.1} parent=1 // pred_check_branch
      %968 = sbr.rel (0) target = $region29
    $region28: #{tpu_custom_call.1} parent=1 // pred_region
      _
    $region29: #{tpu_custom_call.1} parent=1 // pred_fallthru
      _
    // Predicated region
    $region30: #{tpu_custom_call.1} parent=1 // pred_check
      _
    $region31: #{tpu_custom_call.1} parent=1 // pred_check_branch
      %970 = sbr.rel (0) target = $region33
    $region32: #{tpu_custom_call.1} parent=1 // pred_region
      _
    $region33: #{tpu_custom_call.1} parent=1 // pred_fallthru
      _
    %971 = vsyncpa [#allocation3], 1
    %972 = vsyncpa [#allocation5], 1

</llo_original>
